<compile_context>
chip_gen: v7x
topology: tpu7x:2x2x1
jax: 0.10.0
libtpu: 0.0.40
codegen_flags: <defaults>
</compile_context>

<pallas_src>
import jax
import jax.numpy as jnp
from jax import lax
from jax.experimental import pallas as pl
from jax.experimental.pallas import tpu as pltpu


# ---------------------------------------------------------------------------
# Fused encoder kernel: conv3x3+ReLU -> maxpool2x2 -> conv3x3+ReLU
# ---------------------------------------------------------------------------
def _encoder_kernel(pat_ref, w1_ref, b1_ref, s_ref, w2_ref, b2_ref, o_ref):
    # pat_ref: (1, 2, 2, 9*Cin, L)  conv1 im2col patches, split by output parity
    # w1_ref : (C1, 9*Cin)          conv1 weights, im2col-flattened
    # b1_ref : (C1, 1)
    # s_ref  : (9, L, L)            precomputed 0/1 shift matrices (one per tap)
    # w2_ref : (C2, 9*C1)           conv2 weights, im2col-flattened
    # b2_ref : (C2, 1)
    # o_ref  : (1, C2, L)           L = Ho*Wo, channel-major (== NCHW flattened)
    w1 = w1_ref[...]                      # (C1, 9*Cin)
    b1 = b1_ref[...]                      # (C1, 1)

    # ---- conv1 (+bias+ReLU) at the four (row, col) output parities ---------
    def conv1_branch(ph, pw):
        patch = pat_ref[0, ph, pw]        # (9*Cin, L)
        y = jnp.dot(w1, patch, preferred_element_type=jnp.float32)   # (C1, L)
        return jnp.maximum(y + b1, 0.0)

    # 2x2 stride-2 max-pool == elementwise max over the four parity branches.
    pooled = jnp.maximum(
        jnp.maximum(conv1_branch(0, 0), conv1_branch(0, 1)),
        jnp.maximum(conv1_branch(1, 0), conv1_branch(1, 1)))         # (C1, L)

    # ---- conv2 (+bias+ReLU) -------------------------------------------------
    # In-kernel im2col of `pooled` via 9 shift-matrix matmuls (MXU only, no
    # unaligned VMEM slicing).  Each shifted map is C1 rows == one sublane tile,
    # so stacking them is alignment-free, and the whole weight contraction is a
    # single (C2, 9*C1) x (9*C1, L) matmul.
    cols = [jnp.dot(pooled, s_ref[k], preferred_element_type=jnp.float32)
            for k in range(9)]                                        # 9 x (C1, L)
    patches2 = jnp.concatenate(cols, axis=0)                          # (9*C1, L)
    y2 = jnp.dot(w2_ref[...], patches2,
                 preferred_element_type=jnp.float32) + b2_ref[...]    # (C2, L)
    o_ref[0] = jnp.maximum(y2, 0.0)


def _conv2_shift_matrices(Ho, Wo):
    """(9, L, L) 0/1 matrices: S_k[l, m] = 1 iff flat pixel l feeds tap k of output m."""
    L = Ho * Wo
    m = jnp.arange(L)
    row_m, col_m = m // Wo, m % Wo
    l = jnp.arange(L)
    mats = []
    for kh in range(3):
        for kw in range(3):
            dh, dw = kh - 1, kw - 1
            src_r, src_c = row_m + dh, col_m + dw
            valid = (src_r >= 0) & (src_r < Ho) & (src_c >= 0) & (src_c < Wo)
            src = src_r * Wo + src_c
            mats.append((l[:, None] == src[None, :]) & valid[None, :])
    return jnp.stack(mats).astype(jnp.float32)


def encoder_forward(x_nchw, params):
    """x_nchw: (B, Cin, H, W) float32; returns (B, C2, H//2, W//2) NCHW."""
    B, Cin, H, W = x_nchw.shape
    C1 = params["w1"].shape[0]
    C2 = params["w2"].shape[0]
    Ho, Wo = H // 2, W // 2
    L = Ho * Wo
    K1 = 9 * Cin
    K2 = 9 * C1

    x = x_nchw.astype(jnp.float32)
    xpad = jnp.pad(x, ((0, 0), (0, 0), (1, 1), (1, 1)))    # (B, Cin, H+2, W+2)

    # im2col for conv1, split by output-pixel parity (layout plumbing only):
    # pat[b, ph, pw, (kh*3+kw)*Cin + ci, oh*Wo + ow] = xpad[b, ci, 2oh+ph+kh, 2ow+pw+kw]
    taps = [xpad[:, :, kh:kh + H, kw:kw + W] for kh in range(3) for kw in range(3)]
    pat = jnp.stack(taps, axis=1)                          # (B, 9, Cin, H, W)
    pat = pat.reshape(B, 9, Cin, Ho, 2, Wo, 2)
    pat = pat.transpose(0, 4, 6, 1, 2, 3, 5)               # (B, 2, 2, 9, Cin, Ho, Wo)
    pat = pat.reshape(B, 2, 2, K1, L)

    # Weights flattened for the im2col dots; shift matrices are shape-only
    # constants (folded at compile time) and DMA'd once (constant index_map).
    w1f = jnp.transpose(params["w1"], (0, 2, 3, 1)).reshape(C1, K1).astype(jnp.float32)
    w2f = jnp.transpose(params["w2"], (0, 2, 3, 1)).reshape(C2, K2).astype(jnp.float32)
    b1 = params["b1"].reshape(C1, 1).astype(jnp.float32)
    b2 = params["b2"].reshape(C2, 1).astype(jnp.float32)
    smats = _conv2_shift_matrices(Ho, Wo)                  # (9, L, L)

    out = pl.pallas_call(
        _encoder_kernel,
        out_shape=jax.ShapeDtypeStruct((B, C2, L), jnp.float32),
        grid_spec=pltpu.PrefetchScalarGridSpec(
            num_scalar_prefetch=0,
            grid=(B,),
            in_specs=[
                pl.BlockSpec((1, 2, 2, K1, L), lambda b: (b, 0, 0, 0, 0)),
                pl.BlockSpec((C1, K1), lambda b: (0, 0)),
                pl.BlockSpec((C1, 1), lambda b: (0, 0)),
                pl.BlockSpec((9, L, L), lambda b: (0, 0, 0)),
                pl.BlockSpec((C2, K2), lambda b: (0, 0)),
                pl.BlockSpec((C2, 1), lambda b: (0, 0)),
            ],
            out_specs=pl.BlockSpec((1, C2, L), lambda b: (b, 0, 0)),
        ),
        compiler_params=pltpu.CompilerParams(
            dimension_semantics=("parallel",)),
    )(pat, w1f, b1, smats, w2f, b2)

    return out.reshape(B, C2, Ho, Wo)                       # NCHW, no transpose needed


# ---------------------------------------------------------------------------
# Pure-JAX reference for numerical validation (no Pallas).
# ---------------------------------------------------------------------------
def reference_forward(x_nchw, params):
    def conv(x, w, b):
        y = lax.conv_general_dilated(
            x, w, (1, 1), "SAME",
            dimension_numbers=("NCHW", "OIHW", "NCHW"))
        return jnp.maximum(y + b[None, :, None, None], 0.0)

    def pool(x):
        B, C, H, W = x.shape
        return x.reshape(B, C, H // 2, 2, W // 2, 2).max(axis=(3, 5))

    x = conv(x_nchw, params["w1"], params["b1"])
    x = pool(x)
    x = conv(x, params["w2"], params["b2"])
    return x


if __name__ == "__main__":
    key = jax.random.PRNGKey(0)
    kx, kw1, kb1, kw2, kb2 = jax.random.split(key, 5)

    B, Cin, H, W = 2, 4, 16, 16
    C1, C2 = 8, 16

    x = jax.random.normal(kx, (B, Cin, H, W), dtype=jnp.float32)
    params = {
        "w1": 0.1 * jax.random.normal(kw1, (C1, Cin, 3, 3), dtype=jnp.float32),
        "b1": 0.1 * jax.random.normal(kb1, (C1,), dtype=jnp.float32),
        "w2": 0.1 * jax.random.normal(kw2, (C2, C1, 3, 3), dtype=jnp.float32),
        "b2": 0.1 * jax.random.normal(kb2, (C2,), dtype=jnp.float32),
    }

    out = jax.jit(encoder_forward)(x, params)
    out = jax.block_until_ready(out)

    ref = reference_forward(x, params)
    assert out.shape == (B, C2, H // 2, W // 2), out.shape
    assert jnp.allclose(out, ref, atol=1e-3, rtol=1e-3), (
        float(jnp.max(jnp.abs(out - ref))))

    print("KERNEL_OK")
</pallas_src>

<mosaic_0001>
module attributes {stable_mosaic.version = 11 : i64} {
  func.func @_encoder_kernel(%arg0: i32, %arg1: memref<1x2x2x36x64xf32, #tpu.memory_space<vmem>>, %arg2: memref<8x36xf32, #tpu.memory_space<vmem>>, %arg3: memref<8x1xf32, #tpu.memory_space<vmem>>, %arg4: memref<9x64x64xf32, #tpu.memory_space<vmem>>, %arg5: memref<16x72xf32, #tpu.memory_space<vmem>>, %arg6: memref<16x1xf32, #tpu.memory_space<vmem>>, %arg7: memref<1x16x64xf32, #tpu.memory_space<vmem>>) attributes {dimension_semantics = [#tpu.dimension_semantics<parallel>], iteration_bounds = array<i64: 2>, scalar_prefetch = 0 : i64, scratch_operands = 0 : i64, tpu.core_type = #tpu.core_type<tc>, window_params = [{transform_indices = @transform_0, window_bounds = array<i64: 1, 2, 2, 36, 64>}, {pipeline_mode = #tpu.pipeline_mode<synchronous>, transform_indices = @transform_1, window_bounds = array<i64: 8, 36>}, {pipeline_mode = #tpu.pipeline_mode<synchronous>, transform_indices = @transform_2, window_bounds = array<i64: 8, 1>}, {pipeline_mode = #tpu.pipeline_mode<synchronous>, transform_indices = @transform_3, window_bounds = array<i64: 9, 64, 64>}, {pipeline_mode = #tpu.pipeline_mode<synchronous>, transform_indices = @transform_4, window_bounds = array<i64: 16, 72>}, {pipeline_mode = #tpu.pipeline_mode<synchronous>, transform_indices = @transform_5, window_bounds = array<i64: 16, 1>}, {transform_indices = @transform_6, window_bounds = array<i64: 1, 16, 64>}]} {
    %c0 = arith.constant 0 : index
    %c0_0 = arith.constant 0 : index
    %0 = vector.load %arg2[%c0, %c0_0] : memref<8x36xf32, #tpu.memory_space<vmem>>, vector<8x36xf32>
    %c0_1 = arith.constant 0 : index
    %c0_2 = arith.constant 0 : index
    %1 = vector.load %arg3[%c0_1, %c0_2] : memref<8x1xf32, #tpu.memory_space<vmem>>, vector<8x1xf32>
    %c0_3 = arith.constant 0 : index
    %c0_4 = arith.constant 0 : index
    %c0_5 = arith.constant 0 : index
    %c0_6 = arith.constant 0 : index
    %c0_7 = arith.constant 0 : index
    %2 = vector.load %arg1[%c0_3, %c0_4, %c0_5, %c0_6, %c0_7] : memref<1x2x2x36x64xf32, #tpu.memory_space<vmem>>, vector<1x1x1x36x64xf32>
    %3 = vector.shape_cast %2 : vector<1x1x1x36x64xf32> to vector<36x64xf32>
    %cst = arith.constant dense<0.000000e+00> : vector<8x64xf32>
    %4 = tpu.matmul %0, %3, %cst {dimension_numbers = #tpu.dot_dimension_numbers<[1], [0], [0], [1], [0, 0, 1, 1], [], []>} : vector<8x36xf32>, vector<36x64xf32>, vector<8x64xf32> -> vector<8x64xf32>
    %5 = vector.broadcast %1 : vector<8x1xf32> to vector<8x64xf32>
    %6 = arith.addf %4, %5 : vector<8x64xf32>
    %cst_8 = arith.constant 0.000000e+00 : f32
    %7 = vector.broadcast %cst_8 : f32 to vector<8x64xf32>
    %8 = arith.maximumf %6, %7 : vector<8x64xf32>
    %c0_9 = arith.constant 0 : index
    %c0_10 = arith.constant 0 : index
    %c1 = arith.constant 1 : index
    %c0_11 = arith.constant 0 : index
    %c0_12 = arith.constant 0 : index
    %9 = vector.load %arg1[%c0_9, %c0_10, %c1, %c0_11, %c0_12] : memref<1x2x2x36x64xf32, #tpu.memory_space<vmem>>, vector<1x1x1x36x64xf32>
    %10 = vector.shape_cast %9 : vector<1x1x1x36x64xf32> to vector<36x64xf32>
    %cst_13 = arith.constant dense<0.000000e+00> : vector<8x64xf32>
    %11 = tpu.matmul %0, %10, %cst_13 {dimension_numbers = #tpu.dot_dimension_numbers<[1], [0], [0], [1], [0, 0, 1, 1], [], []>} : vector<8x36xf32>, vector<36x64xf32>, vector<8x64xf32> -> vector<8x64xf32>
    %12 = vector.broadcast %1 : vector<8x1xf32> to vector<8x64xf32>
    %13 = arith.addf %11, %12 : vector<8x64xf32>
    %cst_14 = arith.constant 0.000000e+00 : f32
    %14 = vector.broadcast %cst_14 : f32 to vector<8x64xf32>
    %15 = arith.maximumf %13, %14 : vector<8x64xf32>
    %16 = arith.maximumf %8, %15 : vector<8x64xf32>
    %c0_15 = arith.constant 0 : index
    %c1_16 = arith.constant 1 : index
    %c0_17 = arith.constant 0 : index
    %c0_18 = arith.constant 0 : index
    %c0_19 = arith.constant 0 : index
    %17 = vector.load %arg1[%c0_15, %c1_16, %c0_17, %c0_18, %c0_19] : memref<1x2x2x36x64xf32, #tpu.memory_space<vmem>>, vector<1x1x1x36x64xf32>
    %18 = vector.shape_cast %17 : vector<1x1x1x36x64xf32> to vector<36x64xf32>
    %cst_20 = arith.constant dense<0.000000e+00> : vector<8x64xf32>
    %19 = tpu.matmul %0, %18, %cst_20 {dimension_numbers = #tpu.dot_dimension_numbers<[1], [0], [0], [1], [0, 0, 1, 1], [], []>} : vector<8x36xf32>, vector<36x64xf32>, vector<8x64xf32> -> vector<8x64xf32>
    %20 = vector.broadcast %1 : vector<8x1xf32> to vector<8x64xf32>
    %21 = arith.addf %19, %20 : vector<8x64xf32>
    %cst_21 = arith.constant 0.000000e+00 : f32
    %22 = vector.broadcast %cst_21 : f32 to vector<8x64xf32>
    %23 = arith.maximumf %21, %22 : vector<8x64xf32>
    %c0_22 = arith.constant 0 : index
    %c1_23 = arith.constant 1 : index
    %c1_24 = arith.constant 1 : index
    %c0_25 = arith.constant 0 : index
    %c0_26 = arith.constant 0 : index
    %24 = vector.load %arg1[%c0_22, %c1_23, %c1_24, %c0_25, %c0_26] : memref<1x2x2x36x64xf32, #tpu.memory_space<vmem>>, vector<1x1x1x36x64xf32>
    %25 = vector.shape_cast %24 : vector<1x1x1x36x64xf32> to vector<36x64xf32>
    %cst_27 = arith.constant dense<0.000000e+00> : vector<8x64xf32>
    %26 = tpu.matmul %0, %25, %cst_27 {dimension_numbers = #tpu.dot_dimension_numbers<[1], [0], [0], [1], [0, 0, 1, 1], [], []>} : vector<8x36xf32>, vector<36x64xf32>, vector<8x64xf32> -> vector<8x64xf32>
    %27 = vector.broadcast %1 : vector<8x1xf32> to vector<8x64xf32>
    %28 = arith.addf %26, %27 : vector<8x64xf32>
    %cst_28 = arith.constant 0.000000e+00 : f32
    %29 = vector.broadcast %cst_28 : f32 to vector<8x64xf32>
    %30 = arith.maximumf %28, %29 : vector<8x64xf32>
    %31 = arith.maximumf %23, %30 : vector<8x64xf32>
    %32 = arith.maximumf %16, %31 : vector<8x64xf32>
    %c0_29 = arith.constant 0 : index
    %c0_30 = arith.constant 0 : index
    %c0_31 = arith.constant 0 : index
    %33 = vector.load %arg4[%c0_29, %c0_30, %c0_31] : memref<9x64x64xf32, #tpu.memory_space<vmem>>, vector<1x64x64xf32>
    %34 = vector.shape_cast %33 : vector<1x64x64xf32> to vector<64x64xf32>
    %cst_32 = arith.constant dense<0.000000e+00> : vector<8x64xf32>
    %35 = tpu.matmul %32, %34, %cst_32 {dimension_numbers = #tpu.dot_dimension_numbers<[1], [0], [0], [1], [0, 0, 1, 1], [], []>} : vector<8x64xf32>, vector<64x64xf32>, vector<8x64xf32> -> vector<8x64xf32>
    %c1_33 = arith.constant 1 : index
    %c0_34 = arith.constant 0 : index
    %c0_35 = arith.constant 0 : index
    %36 = vector.load %arg4[%c1_33, %c0_34, %c0_35] : memref<9x64x64xf32, #tpu.memory_space<vmem>>, vector<1x64x64xf32>
    %37 = vector.shape_cast %36 : vector<1x64x64xf32> to vector<64x64xf32>
    %cst_36 = arith.constant dense<0.000000e+00> : vector<8x64xf32>
    %38 = tpu.matmul %32, %37, %cst_36 {dimension_numbers = #tpu.dot_dimension_numbers<[1], [0], [0], [1], [0, 0, 1, 1], [], []>} : vector<8x64xf32>, vector<64x64xf32>, vector<8x64xf32> -> vector<8x64xf32>
    %c2 = arith.constant 2 : index
    %c0_37 = arith.constant 0 : index
    %c0_38 = arith.constant 0 : index
    %39 = vector.load %arg4[%c2, %c0_37, %c0_38] : memref<9x64x64xf32, #tpu.memory_space<vmem>>, vector<1x64x64xf32>
    %40 = vector.shape_cast %39 : vector<1x64x64xf32> to vector<64x64xf32>
    %cst_39 = arith.constant dense<0.000000e+00> : vector<8x64xf32>
    %41 = tpu.matmul %32, %40, %cst_39 {dimension_numbers = #tpu.dot_dimension_numbers<[1], [0], [0], [1], [0, 0, 1, 1], [], []>} : vector<8x64xf32>, vector<64x64xf32>, vector<8x64xf32> -> vector<8x64xf32>
    %c3 = arith.constant 3 : index
    %c0_40 = arith.constant 0 : index
    %c0_41 = arith.constant 0 : index
    %42 = vector.load %arg4[%c3, %c0_40, %c0_41] : memref<9x64x64xf32, #tpu.memory_space<vmem>>, vector<1x64x64xf32>
    %43 = vector.shape_cast %42 : vector<1x64x64xf32> to vector<64x64xf32>
    %cst_42 = arith.constant dense<0.000000e+00> : vector<8x64xf32>
    %44 = tpu.matmul %32, %43, %cst_42 {dimension_numbers = #tpu.dot_dimension_numbers<[1], [0], [0], [1], [0, 0, 1, 1], [], []>} : vector<8x64xf32>, vector<64x64xf32>, vector<8x64xf32> -> vector<8x64xf32>
    %c4 = arith.constant 4 : index
    %c0_43 = arith.constant 0 : index
    %c0_44 = arith.constant 0 : index
    %45 = vector.load %arg4[%c4, %c0_43, %c0_44] : memref<9x64x64xf32, #tpu.memory_space<vmem>>, vector<1x64x64xf32>
    %46 = vector.shape_cast %45 : vector<1x64x64xf32> to vector<64x64xf32>
    %cst_45 = arith.constant dense<0.000000e+00> : vector<8x64xf32>
    %47 = tpu.matmul %32, %46, %cst_45 {dimension_numbers = #tpu.dot_dimension_numbers<[1], [0], [0], [1], [0, 0, 1, 1], [], []>} : vector<8x64xf32>, vector<64x64xf32>, vector<8x64xf32> -> vector<8x64xf32>
    %c5 = arith.constant 5 : index
    %c0_46 = arith.constant 0 : index
    %c0_47 = arith.constant 0 : index
    %48 = vector.load %arg4[%c5, %c0_46, %c0_47] : memref<9x64x64xf32, #tpu.memory_space<vmem>>, vector<1x64x64xf32>
    %49 = vector.shape_cast %48 : vector<1x64x64xf32> to vector<64x64xf32>
    %cst_48 = arith.constant dense<0.000000e+00> : vector<8x64xf32>
    %50 = tpu.matmul %32, %49, %cst_48 {dimension_numbers = #tpu.dot_dimension_numbers<[1], [0], [0], [1], [0, 0, 1, 1], [], []>} : vector<8x64xf32>, vector<64x64xf32>, vector<8x64xf32> -> vector<8x64xf32>
    %c6 = arith.constant 6 : index
    %c0_49 = arith.constant 0 : index
    %c0_50 = arith.constant 0 : index
    %51 = vector.load %arg4[%c6, %c0_49, %c0_50] : memref<9x64x64xf32, #tpu.memory_space<vmem>>, vector<1x64x64xf32>
    %52 = vector.shape_cast %51 : vector<1x64x64xf32> to vector<64x64xf32>
    %cst_51 = arith.constant dense<0.000000e+00> : vector<8x64xf32>
    %53 = tpu.matmul %32, %52, %cst_51 {dimension_numbers = #tpu.dot_dimension_numbers<[1], [0], [0], [1], [0, 0, 1, 1], [], []>} : vector<8x64xf32>, vector<64x64xf32>, vector<8x64xf32> -> vector<8x64xf32>
    %c7 = arith.constant 7 : index
    %c0_52 = arith.constant 0 : index
    %c0_53 = arith.constant 0 : index
    %54 = vector.load %arg4[%c7, %c0_52, %c0_53] : memref<9x64x64xf32, #tpu.memory_space<vmem>>, vector<1x64x64xf32>
    %55 = vector.shape_cast %54 : vector<1x64x64xf32> to vector<64x64xf32>
    %cst_54 = arith.constant dense<0.000000e+00> : vector<8x64xf32>
    %56 = tpu.matmul %32, %55, %cst_54 {dimension_numbers = #tpu.dot_dimension_numbers<[1], [0], [0], [1], [0, 0, 1, 1], [], []>} : vector<8x64xf32>, vector<64x64xf32>, vector<8x64xf32> -> vector<8x64xf32>
    %c8 = arith.constant 8 : index
    %c0_55 = arith.constant 0 : index
    %c0_56 = arith.constant 0 : index
    %57 = vector.load %arg4[%c8, %c0_55, %c0_56] : memref<9x64x64xf32, #tpu.memory_space<vmem>>, vector<1x64x64xf32>
    %58 = vector.shape_cast %57 : vector<1x64x64xf32> to vector<64x64xf32>
    %cst_57 = arith.constant dense<0.000000e+00> : vector<8x64xf32>
    %59 = tpu.matmul %32, %58, %cst_57 {dimension_numbers = #tpu.dot_dimension_numbers<[1], [0], [0], [1], [0, 0, 1, 1], [], []>} : vector<8x64xf32>, vector<64x64xf32>, vector<8x64xf32> -> vector<8x64xf32>
    %60 = tpu.concatenate %35, %38, %41, %44, %47, %50, %53, %56, %59 in 0 : vector<8x64xf32>, vector<8x64xf32>, vector<8x64xf32>, vector<8x64xf32>, vector<8x64xf32>, vector<8x64xf32>, vector<8x64xf32>, vector<8x64xf32>, vector<8x64xf32> -> vector<72x64xf32>
    %c0_58 = arith.constant 0 : index
    %c0_59 = arith.constant 0 : index
    %61 = vector.load %arg5[%c0_58, %c0_59] : memref<16x72xf32, #tpu.memory_space<vmem>>, vector<16x72xf32>
    %cst_60 = arith.constant dense<0.000000e+00> : vector<16x64xf32>
    %62 = tpu.matmul %61, %60, %cst_60 {dimension_numbers = #tpu.dot_dimension_numbers<[1], [0], [0], [1], [0, 0, 1, 1], [], []>} : vector<16x72xf32>, vector<72x64xf32>, vector<16x64xf32> -> vector<16x64xf32>
    %c0_61 = arith.constant 0 : index
    %c0_62 = arith.constant 0 : index
    %63 = vector.load %arg6[%c0_61, %c0_62] : memref<16x1xf32, #tpu.memory_space<vmem>>, vector<16x1xf32>
    %64 = vector.broadcast %63 : vector<16x1xf32> to vector<16x64xf32>
    %65 = arith.addf %62, %64 : vector<16x64xf32>
    %cst_63 = arith.constant 0.000000e+00 : f32
    %66 = vector.broadcast %cst_63 : f32 to vector<16x64xf32>
    %67 = arith.maximumf %65, %66 : vector<16x64xf32>
    %c0_64 = arith.constant 0 : index
    %c0_65 = arith.constant 0 : index
    %c0_66 = arith.constant 0 : index
    %68 = vector.load %arg7[%c0_64, %c0_65, %c0_66] : memref<1x16x64xf32, #tpu.memory_space<vmem>>, vector<1x16x64xf32>
    %69 = vector.shape_cast %68 : vector<1x16x64xf32> to vector<16x64xf32>
    %70 = vector.shape_cast %67 : vector<16x64xf32> to vector<1x16x64xf32>
    tpu.vector_store %arg7[%c0_64, %c0_65, %c0_66], %70 {strides = array<i32>} : memref<1x16x64xf32, #tpu.memory_space<vmem>>, vector<1x16x64xf32>,
    return
  }
  func.func @transform_0(%arg0: i32) -> (i32, i32, i32, i32, i32) {
    %c0_i32 = arith.constant 0 : i32
    %c0_i32_0 = arith.constant 0 : i32
    %c0_i32_1 = arith.constant 0 : i32
    %c0_i32_2 = arith.constant 0 : i32
    %c0_i32_3 = arith.constant 0 : i32
    return %arg0, %c0_i32, %c0_i32_0, %c0_i32_1, %c0_i32_2 : i32, i32, i32, i32, i32
  }
  func.func @transform_1(%arg0: i32) -> (i32, i32) {
    %c0_i32 = arith.constant 0 : i32
    %c0_i32_0 = arith.constant 0 : i32
    %c0_i32_1 = arith.constant 0 : i32
    return %c0_i32, %c0_i32_0 : i32, i32
  }
  func.func @transform_2(%arg0: i32) -> (i32, i32) {
    %c0_i32 = arith.constant 0 : i32
    %c0_i32_0 = arith.constant 0 : i32
    %c0_i32_1 = arith.constant 0 : i32
    return %c0_i32, %c0_i32_0 : i32, i32
  }
  func.func @transform_3(%arg0: i32) -> (i32, i32, i32) {
    %c0_i32 = arith.constant 0 : i32
    %c0_i32_0 = arith.constant 0 : i32
    %c0_i32_1 = arith.constant 0 : i32
    %c0_i32_2 = arith.constant 0 : i32
    return %c0_i32, %c0_i32_0, %c0_i32_1 : i32, i32, i32
  }
  func.func @transform_4(%arg0: i32) -> (i32, i32) {
    %c0_i32 = arith.constant 0 : i32
    %c0_i32_0 = arith.constant 0 : i32
    %c0_i32_1 = arith.constant 0 : i32
    return %c0_i32, %c0_i32_0 : i32, i32
  }
  func.func @transform_5(%arg0: i32) -> (i32, i32) {
    %c0_i32 = arith.constant 0 : i32
    %c0_i32_0 = arith.constant 0 : i32
    %c0_i32_1 = arith.constant 0 : i32
    return %c0_i32, %c0_i32_0 : i32, i32
  }
  func.func @transform_6(%arg0: i32) -> (i32, i32, i32) {
    %c0_i32 = arith.constant 0 : i32
    %c0_i32_0 = arith.constant 0 : i32
    %c0_i32_1 = arith.constant 0 : i32
    return %arg0, %c0_i32, %c0_i32_0 : i32, i32, i32
  }
}

</mosaic_0001>

<llo_original>
// kernel: encoder_forward.1
$region0: #{encoder_forward.1}
  #allocation0 [shape = 'u32[]', space=smem, size = 0x4, offset = 0x4, fixed_abs, tag = 'smem constant byte address 0x4 - core index']
  #allocation1 [shape = 'u32[144,128]{1,0:T(1,128)}', space=vmem, size = 0x12000, scoped, tag = 'internal scratch']
  %s0 = inlined_call_operand.vmem [shape: f32[2,2,2,36,64], index: 0, kind: input, shape index: {}]
  %s1 = inlined_call_operand.vmem [shape: f32[8,36], index: 1, kind: input, shape index: {}]
  %s2 = inlined_call_operand.vmem [shape: f32[8,1], index: 2, kind: input, shape index: {}]
  %s3 = inlined_call_operand.vmem [shape: f32[9,64,64], index: 3, kind: input, shape index: {}]
  %s4 = inlined_call_operand.vmem [shape: f32[16,72], index: 4, kind: input, shape index: {}]
  %s5 = inlined_call_operand.vmem [shape: f32[16,1], index: 5, kind: input, shape index: {}]
  %s6 = inlined_call_operand.vmem [shape: f32[2,16,64], index: 6, kind: output, shape index: {}]
  %s7 = sld [smem:[#allocation0]]
  $region57: #{encoder_forward.1} parent=0
    _
  %s9 = ssub.s32 1, %s7
  %s10 = scalar_select 0, %s9, %s7
  loop: start=0, step=1, limit=4
  $region2: #{encoder_forward.1} parent=0 // loop_pre_header
    _
  $region3: #{encoder_forward.1} parent=0 // loop_header
    %s12 = sphi 0, %s16
    %p13 = scmp.ge.s32.totalorder %s12, 4
    %s22 = sphi 0, %s24
    %s25 = sphi 0, %s22
    %s26 = sphi 0, %s25
    %s42 = sphi 0, %s26
    %s46 = sphi 0, %s46
    %s48 = sphi 0, %s46
    %s49 = sphi 0, %s48
    %s63 = sphi 0, %s49
    %s67 = sphi 0, %s67
    %s69 = sphi 0, %s67
    %s70 = sphi 0, %s69
    %s84 = sphi 0, %s70
    %s88 = sphi 0, %s88
    %s90 = sphi 0, %s88
    %s91 = sphi 0, %s90
    %s105 = sphi 0, %s91
    %s109 = sphi 0, %s109
    %s111 = sphi 0, %s109
    %s112 = sphi 0, %s111
    %s126 = sphi 0, %s112
    %s130 = sphi 0, %s130
    %s132 = sphi 0, %s130
    %s133 = sphi 0, %s132
    %s147 = sphi 0, %s133
    %s153 = sphi 0, %s155
    %s156 = sphi 0, %s153
    %s157 = sphi 0, %s156
    %s173 = sphi 0, %s157
  $region4: #{encoder_forward.1} parent=0 // loop_header_branch
    %15 = sbr.rel (%p13) target = $region8
  $region5: #{encoder_forward.1} parent=0 // loop_body
    %s17 = ssub.s32 %s12, 1
    %s18 = ssub.s32 %s12, 2
    %s19 = sadd.s32 %s12, 1
    %s20 = ssub.s32 %s12, %s19
    %p21 = scmp.eq.s32.totalorder %s20, 0
    %s23 = sadd.s32 %s22, 1
    %s24 = scalar_select %p21, %s22, %s23
    %p27 = pneg %p21
    %p28 = scmp.eq.s32.totalorder %s12, 1
    %p29 = por %p27, %p28
    %p30 = scmp.ne.s32.totalorder %s22, %s25
    %p31 = scmp.eq.s32.totalorder %s12, 0
    %p32 = por %p30, %p31
    %p33 = scmp.ne.s32.totalorder %s22, %s25
    %p34 = scmp.eq.s32.totalorder %s17, 1
    %p35 = por %p33, %p34
    %p36 = scmp.ne.s32.totalorder %s25, %s26
    %p37 = scmp.eq.s32.totalorder %s17, 0
    %p38 = por %p36, %p37
    %p39 = scmp.ne.s32.totalorder %s25, %s26
    %p40 = scmp.eq.s32.totalorder %s18, 1
    %p41 = por %p39, %p40
    %p43 = scmp.ne.s32.totalorder %s26, %s42
    %p44 = scmp.eq.s32.totalorder %s18, 0
    %p45 = por %p43, %p44
    %s47 = sadd.s32 %s46, 1
    %p50 = scmp.eq.s32.totalorder %s12, 1
    %p51 = scmp.ne.s32.totalorder %s46, %s48
    %p52 = scmp.eq.s32.totalorder %s12, 0
    %p53 = por %p51, %p52
    %p54 = scmp.ne.s32.totalorder %s46, %s48
    %p55 = scmp.eq.s32.totalorder %s17, 1
    %p56 = por %p54, %p55
    %p57 = scmp.ne.s32.totalorder %s48, %s49
    %p58 = scmp.eq.s32.totalorder %s17, 0
    %p59 = por %p57, %p58
    %p60 = scmp.ne.s32.totalorder %s48, %s49
    %p61 = scmp.eq.s32.totalorder %s18, 1
    %p62 = por %p60, %p61
    %p64 = scmp.ne.s32.totalorder %s49, %s63
    %p65 = scmp.eq.s32.totalorder %s18, 0
    %p66 = por %p64, %p65
    %s68 = sadd.s32 %s67, 1
    %p71 = scmp.eq.s32.totalorder %s12, 1
    %p72 = scmp.ne.s32.totalorder %s67, %s69
    %p73 = scmp.eq.s32.totalorder %s12, 0
    %p74 = por %p72, %p73
    %p75 = scmp.ne.s32.totalorder %s67, %s69
    %p76 = scmp.eq.s32.totalorder %s17, 1
    %p77 = por %p75, %p76
    %p78 = scmp.ne.s32.totalorder %s69, %s70
    %p79 = scmp.eq.s32.totalorder %s17, 0
    %p80 = por %p78, %p79
    %p81 = scmp.ne.s32.totalorder %s69, %s70
    %p82 = scmp.eq.s32.totalorder %s18, 1
    %p83 = por %p81, %p82
    %p85 = scmp.ne.s32.totalorder %s70, %s84
    %p86 = scmp.eq.s32.totalorder %s18, 0
    %p87 = por %p85, %p86
    %s89 = sadd.s32 %s88, 1
    %p92 = scmp.eq.s32.totalorder %s12, 1
    %p93 = scmp.ne.s32.totalorder %s88, %s90
    %p94 = scmp.eq.s32.totalorder %s12, 0
    %p95 = por %p93, %p94
    %p96 = scmp.ne.s32.totalorder %s88, %s90
    %p97 = scmp.eq.s32.totalorder %s17, 1
    %p98 = por %p96, %p97
    %p99 = scmp.ne.s32.totalorder %s90, %s91
    %p100 = scmp.eq.s32.totalorder %s17, 0
    %p101 = por %p99, %p100
    %p102 = scmp.ne.s32.totalorder %s90, %s91
    %p103 = scmp.eq.s32.totalorder %s18, 1
    %p104 = por %p102, %p103
    %p106 = scmp.ne.s32.totalorder %s91, %s105
    %p107 = scmp.eq.s32.totalorder %s18, 0
    %p108 = por %p106, %p107
    %s110 = sadd.s32 %s109, 1
    %p113 = scmp.eq.s32.totalorder %s12, 1
    %p114 = scmp.ne.s32.totalorder %s109, %s111
    %p115 = scmp.eq.s32.totalorder %s12, 0
    %p116 = por %p114, %p115
    %p117 = scmp.ne.s32.totalorder %s109, %s111
    %p118 = scmp.eq.s32.totalorder %s17, 1
    %p119 = por %p117, %p118
    %p120 = scmp.ne.s32.totalorder %s111, %s112
    %p121 = scmp.eq.s32.totalorder %s17, 0
    %p122 = por %p120, %p121
    %p123 = scmp.ne.s32.totalorder %s111, %s112
    %p124 = scmp.eq.s32.totalorder %s18, 1
    %p125 = por %p123, %p124
    %p127 = scmp.ne.s32.totalorder %s112, %s126
    %p128 = scmp.eq.s32.totalorder %s18, 0
    %p129 = por %p127, %p128
    %s131 = sadd.s32 %s130, 1
    %p134 = scmp.eq.s32.totalorder %s12, 1
    %p135 = scmp.ne.s32.totalorder %s130, %s132
    %p136 = scmp.eq.s32.totalorder %s12, 0
    %p137 = por %p135, %p136
    %p138 = scmp.ne.s32.totalorder %s130, %s132
    %p139 = scmp.eq.s32.totalorder %s17, 1
    %p140 = por %p138, %p139
    %p141 = scmp.ne.s32.totalorder %s132, %s133
    %p142 = scmp.eq.s32.totalorder %s17, 0
    %p143 = por %p141, %p142
    %p144 = scmp.ne.s32.totalorder %s132, %s133
    %p145 = scmp.eq.s32.totalorder %s18, 1
    %p146 = por %p144, %p145
    %p148 = scmp.ne.s32.totalorder %s133, %s147
    %p149 = scmp.eq.s32.totalorder %s18, 0
    %p150 = por %p148, %p149
    %s151 = ssub.s32 %s12, %s19
    %p152 = scmp.eq.s32.totalorder %s151, 0
    %s154 = sadd.s32 %s153, 1
    %s155 = scalar_select %p152, %s153, %s154
    %p158 = pneg %p152
    %p159 = scmp.eq.s32.totalorder %s12, 1
    %p160 = por %p158, %p159
    %p161 = scmp.ne.s32.totalorder %s153, %s156
    %p162 = scmp.eq.s32.totalorder %s12, 0
    %p163 = por %p161, %p162
    %p164 = scmp.ne.s32.totalorder %s153, %s156
    %p165 = scmp.eq.s32.totalorder %s17, 1
    %p166 = por %p164, %p165
    %p167 = scmp.ne.s32.totalorder %s156, %s157
    %p168 = scmp.eq.s32.totalorder %s17, 0
    %p169 = por %p167, %p168
    %p170 = scmp.ne.s32.totalorder %s156, %s157
    %p171 = scmp.eq.s32.totalorder %s18, 1
    %p172 = por %p170, %p171
    %p174 = scmp.ne.s32.totalorder %s157, %s173
    %p175 = scmp.eq.s32.totalorder %s18, 0
    %p176 = por %p174, %p175
    %p177 = scmp.le.s32.totalorder 1, %s12
    %p178 = scmp.lt.s32.totalorder %s12, 3
    %p179 = pnand %p177, %p178
    %p180 = pneg %p179
    // Predicated region
    $region9: #{encoder_forward.1} parent=5 // pred_check
      _
    $region10: #{encoder_forward.1} parent=5 // pred_check_branch
      %182 = sbr.rel (%p179) target = $region12
    $region11: #{encoder_forward.1} parent=5 // pred_region
      %s183 = ssub.s32 %s12, 1
      // Predicated region
      $region13: #{encoder_forward.1} parent=11 // pred_check
        %p184 = pneg %p59
      $region14: #{encoder_forward.1} parent=11 // pred_check_branch
        %186 = sbr.rel (%p184) target = $region16
      $region15: #{encoder_forward.1} parent=11 // pred_region
        _
      $region16: #{encoder_forward.1} parent=11 // pred_fallthru
        _
      // Predicated region
      $region17: #{encoder_forward.1} parent=11 // pred_check
        %p187 = pneg %p80
      $region18: #{encoder_forward.1} parent=11 // pred_check_branch
        %189 = sbr.rel (%p187) target = $region20
      $region19: #{encoder_forward.1} parent=11 // pred_region
        _
      $region20: #{encoder_forward.1} parent=11 // pred_fallthru
        _
      // Predicated region
      $region21: #{encoder_forward.1} parent=11 // pred_check
        %p190 = pneg %p101
      $region22: #{encoder_forward.1} parent=11 // pred_check_branch
        %192 = sbr.rel (%p190) target = $region24
      $region23: #{encoder_forward.1} parent=11 // pred_region
        _
      $region24: #{encoder_forward.1} parent=11 // pred_fallthru
        _
      // Predicated region
      $region25: #{encoder_forward.1} parent=11 // pred_check
        %p193 = pneg %p122
      $region26: #{encoder_forward.1} parent=11 // pred_check_branch
        %195 = sbr.rel (%p193) target = $region28
      $region27: #{encoder_forward.1} parent=11 // pred_region
        _
      $region28: #{encoder_forward.1} parent=11 // pred_fallthru
        _
      // Predicated region
      $region29: #{encoder_forward.1} parent=11 // pred_check
        %p196 = pneg %p143
      $region30: #{encoder_forward.1} parent=11 // pred_check_branch
        %198 = sbr.rel (%p196) target = $region32
      $region31: #{encoder_forward.1} parent=11 // pred_region
        _
      $region32: #{encoder_forward.1} parent=11 // pred_fallthru
        _
    $region12: #{encoder_forward.1} parent=5 // pred_fallthru
      _
    %p199 = scmp.lt.s32.totalorder %s12, 2
    // Predicated region
    $region33: #{encoder_forward.1} parent=5 // pred_check
      %p200 = pneg %p199
    $region34: #{encoder_forward.1} parent=5 // pred_check_branch
      %202 = sbr.rel (%p200) target = $region36
    $region35: #{encoder_forward.1} parent=5 // pred_region
      // Predicated region
      $region37: #{encoder_forward.1} parent=35 // pred_check
        %p203 = pneg %p32
      $region38: #{encoder_forward.1} parent=35 // pred_check_branch
        %205 = sbr.rel (%p203) target = $region40
      $region39: #{encoder_forward.1} parent=35 // pred_region
        %p206 = scmp.lt.s32.totalorder %s12, 1
        %s207 = scalar_select %p206, %s12, 1
        %s208 = smul.addr %s207, 20
        %s209 = smul.addr %s208, 8
        %s210 = scalar_lea.vmem %s0, %s209
      $region40: #{encoder_forward.1} parent=35 // pred_fallthru
        _
    $region36: #{encoder_forward.1} parent=5 // pred_fallthru
      _
    %p211 = scmp.le.s32.totalorder 1, %s12
    %p212 = scmp.lt.s32.totalorder %s12, 3
    %p213 = pnand %p211, %p212
    %p214 = pneg %p213
    // Predicated region
    $region41: #{encoder_forward.1} parent=5 // pred_check
      _
    $region42: #{encoder_forward.1} parent=5 // pred_check_branch
      %216 = sbr.rel (%p213) target = $region44
    $region43: #{encoder_forward.1} parent=5 // pred_region
      %s217 = ssub.s32 %s12, 1
      %p218 = scmp.lt.s32.totalorder %s17, 1
      %s219 = scalar_select %p218, %s17, 1
      %s220 = smul.addr %s219, 20
      %s221 = smul.addr %s220, 8
      %s222 = scalar_lea.vmem %s0, %s221
      %p223 = pneg %p38
      %p224 = pneg %p35
      %p225 = pneg %p59
      %p226 = pneg %p56
      %p227 = pneg %p80
      %p228 = pneg %p77
      %p229 = pneg %p101
      %p230 = pneg %p98
      %p231 = pneg %p122
      %p232 = pneg %p119
      %p233 = pneg %p143
      %p234 = pneg %p140
      %p235 = pneg %p169
      %p236 = pneg %p166
      %p237 = scmp.lt.s32.totalorder %s17, 1
      %s238 = scalar_select %p237, %s17, 1
      %s239 = smul.addr %s238, 2
      %s240 = smul.addr %s239, 8
      %s241 = scalar_lea.vmem %s6, %s240
      %p242 = scmp.lt.s32.totalorder %s17, 1
      %s243 = scalar_select %p242, %s17, 1
      %s244 = smul.addr %s243, 20
      %s245 = smul.addr %s244, 8
      %s246 = scalar_lea.vmem %s0, %s245
      %p247 = scmp.lt.s32.totalorder %s17, 1
      %s248 = scalar_select %p247, %s17, 1
      %s249 = smul.addr %s248, 2
      %s250 = smul.addr %s249, 8
      %s251 = scalar_lea.vmem %s6, %s250
      %v252 = vld [vmem:[%s1] sm:$0xff]
      %v253 = vld [vmem:[%s2] sm:$0xff]
      %v254 = vld [vmem:[%s246] sm:$0xff]
      %v255 = vld [vmem:[%s246 + $0x8] sm:$0xff]
      %v256 = vld [vmem:[%s246 + $0x10] sm:$0xff]
      %v257 = vld [vmem:[%s246 + $0x18] sm:$0xff]
      %v258 = vld [vmem:[%s246 + $0x20] sm:$0xf]
      %260 = vset.pattern.permute.xlu0 0
      %261 = vperm.xlu0 %260, %v253
      %v262 = vpop.permute.xlu0 %261
      %vm264 = vcmask 293888
      %v266 = vsel %vm264, %v252, 0
      %vm268 = vcmask 1043456
      %v270 = vsel %vm268, %v258, 0
      %272 = vmatprep.subr.mxu0 0.0
      %273 = vmatpush1.msra.mxu0 %v254
      %274 = vmatprep.subr.mxu0 0.0
      %275 = vmatpush1.msra.mxu0 %v255
      %276 = vmatprep.subr.mxu0 0.0
      %277 = vmatpush1.msra.mxu0 %v256
      %278 = vmatprep.subr.mxu0 0.0
      %279 = vmatpush1.msra.mxu0 %v257
      %280 = vmatprep.subr.mxu0 0.0
      %281 = vmatpush1.msra.mxu0 %v270
      %282 = vmatprep.subr.mxu0 0.0
      %283 = vmatpush1.msra.mxu0 0.0
      %284 = vmatprep.subr.mxu0 0.0
      %285 = vmatpush1.msra.mxu0 0.0
      %286 = vmatprep.subr.mxu0 0.0
      %287 = vmatpush1.msra.mxu0 0.0
      %288 = vmatprep.subr.mxu0 0.0
      %289 = vmatpush1.msra.mxu0 0.0
      %290 = vmatprep.subr.mxu0 0.0
      %291 = vmatpush1.msra.mxu0 0.0
      %292 = vmatprep.subr.mxu0 0.0
      %293 = vmatpush1.msra.mxu0 0.0
      %294 = vmatprep.subr.mxu0 0.0
      %295 = vmatpush1.msra.mxu0 0.0
      %296 = vmatprep.subr.mxu0 0.0
      %297 = vmatpush1.msra.mxu0 0.0
      %298 = vmatprep.subr.mxu0 0.0
      %299 = vmatpush1.msra.mxu0 0.0
      %300 = vmatprep.subr.mxu0 0.0
      %301 = vmatpush1.msra.mxu0 0.0
      %302 = vmatprep.subr.mxu0 0.0
      %303 = vmatpush1.msra.mxu0 0.0
      %304 = vmatprep.subr.mxu0 0.0
      %305 = vmatpush1.msra.mxu0 0.0
      %306 = vmatprep.subr.mxu0 0.0
      %307 = vmatpush1.msra.mxu0 0.0
      %308 = vmatprep.subr.mxu0 0.0
      %309 = vmatpush1.msra.mxu0 0.0
      %310 = vmatprep.subr.mxu0 0.0
      %311 = vmatpush1.msra.mxu0 0.0
      %312 = vmatprep.subr.mxu0 0.0
      %313 = vmatpush1.msra.mxu0 0.0
      %314 = vmatprep.subr.mxu0 0.0
      %315 = vmatpush1.msra.mxu0 0.0
      %316 = vmatprep.subr.mxu0 0.0
      %317 = vmatpush1.msra.mxu0 0.0
      %318 = vmatprep.subr.mxu0 0.0
      %319 = vmatpush1.msra.mxu0 0.0
      %320 = vmatprep.subr.mxu0 0.0
      %321 = vmatpush1.msra.mxu0 0.0
      %322 = vmatprep.subr.mxu0 0.0
      %323 = vmatpush1.msra.mxu0 0.0
      %324 = vmatprep.subr.mxu0 0.0
      %325 = vmatpush1.msra.mxu0 0.0
      %326 = vmatprep.subr.mxu0 0.0
      %327 = vmatpush1.msra.mxu0 0.0
      %328 = vmatprep.subr.mxu0 0.0
      %329 = vmatpush1.msra.mxu0 0.0
      %330 = vmatprep.subr.mxu0 0.0
      %331 = vmatpush1.msra.mxu0 0.0
      %332 = vmatprep.subr.mxu0 0.0
      %333 = vmatpush1.msra.mxu0 0.0
      %334 = vmatprep.subr.mxu0 0.0
      %335 = vmatpush1.msra.mxu0 0.0
      %336 = vmatprep.mubr.f32.mxu0 0.0
      %337 = vmatmul.mubr.f32.gmra.mrb[0].mxu0 %v266
      %v338 = vpop.f32.mrb[0].mxu0
      %v339 = vadd.f32 %v262, %v338
      %v340 = vpop.f32.mrb[0].mxu0
      %341 = vdwg.mxu0
      %v342 = vmax.f32 %v339, 0.0
      %s343 = scalar_lea.vmem %s246, 40
      %v344 = vld [vmem:[%s343] sm:$0xff]
      %v345 = vld [vmem:[%s343 + $0x8] sm:$0xff]
      %v346 = vld [vmem:[%s343 + $0x10] sm:$0xff]
      %v347 = vld [vmem:[%s343 + $0x18] sm:$0xff]
      %v348 = vld [vmem:[%s343 + $0x20] sm:$0xf]
      %v350 = vsel %vm268, %v348, 0
      %352 = vmatprep.subr.mxu0 0.0
      %353 = vmatpush1.msra.mxu0 %v344
      %354 = vmatprep.subr.mxu0 0.0
      %355 = vmatpush1.msra.mxu0 %v345
      %356 = vmatprep.subr.mxu0 0.0
      %357 = vmatpush1.msra.mxu0 %v346
      %358 = vmatprep.subr.mxu0 0.0
      %359 = vmatpush1.msra.mxu0 %v347
      %360 = vmatprep.subr.mxu0 0.0
      %361 = vmatpush1.msra.mxu0 %v350
      %362 = vmatprep.subr.mxu0 0.0
      %363 = vmatpush1.msra.mxu0 0.0
      %364 = vmatprep.subr.mxu0 0.0
      %365 = vmatpush1.msra.mxu0 0.0
      %366 = vmatprep.subr.mxu0 0.0
      %367 = vmatpush1.msra.mxu0 0.0
      %368 = vmatprep.subr.mxu0 0.0
      %369 = vmatpush1.msra.mxu0 0.0
      %370 = vmatprep.subr.mxu0 0.0
      %371 = vmatpush1.msra.mxu0 0.0
      %372 = vmatprep.subr.mxu0 0.0
      %373 = vmatpush1.msra.mxu0 0.0
      %374 = vmatprep.subr.mxu0 0.0
      %375 = vmatpush1.msra.mxu0 0.0
      %376 = vmatprep.subr.mxu0 0.0
      %377 = vmatpush1.msra.mxu0 0.0
      %378 = vmatprep.subr.mxu0 0.0
      %379 = vmatpush1.msra.mxu0 0.0
      %380 = vmatprep.subr.mxu0 0.0
      %381 = vmatpush1.msra.mxu0 0.0
      %382 = vmatprep.subr.mxu0 0.0
      %383 = vmatpush1.msra.mxu0 0.0
      %384 = vmatprep.subr.mxu0 0.0
      %385 = vmatpush1.msra.mxu0 0.0
      %386 = vmatprep.subr.mxu0 0.0
      %387 = vmatpush1.msra.mxu0 0.0
      %388 = vmatprep.subr.mxu0 0.0
      %389 = vmatpush1.msra.mxu0 0.0
      %390 = vmatprep.subr.mxu0 0.0
      %391 = vmatpush1.msra.mxu0 0.0
      %392 = vmatprep.subr.mxu0 0.0
      %393 = vmatpush1.msra.mxu0 0.0
      %394 = vmatprep.subr.mxu0 0.0
      %395 = vmatpush1.msra.mxu0 0.0
      %396 = vmatprep.subr.mxu0 0.0
      %397 = vmatpush1.msra.mxu0 0.0
      %398 = vmatprep.subr.mxu0 0.0
      %399 = vmatpush1.msra.mxu0 0.0
      %400 = vmatprep.subr.mxu0 0.0
      %401 = vmatpush1.msra.mxu0 0.0
      %402 = vmatprep.subr.mxu0 0.0
      %403 = vmatpush1.msra.mxu0 0.0
      %404 = vmatprep.subr.mxu0 0.0
      %405 = vmatpush1.msra.mxu0 0.0
      %406 = vmatprep.subr.mxu0 0.0
      %407 = vmatpush1.msra.mxu0 0.0
      %408 = vmatprep.subr.mxu0 0.0
      %409 = vmatpush1.msra.mxu0 0.0
      %410 = vmatprep.subr.mxu0 0.0
      %411 = vmatpush1.msra.mxu0 0.0
      %412 = vmatprep.subr.mxu0 0.0
      %413 = vmatpush1.msra.mxu0 0.0
      %414 = vmatprep.subr.mxu0 0.0
      %415 = vmatpush1.msra.mxu0 0.0
      %416 = vmatprep.mubr.f32.mxu0 0.0
      %417 = vmatmul.mubr.f32.gmra.mrb[0].mxu0 %v266
      %v418 = vpop.f32.mrb[0].mxu0
      %v419 = vadd.f32 %v262, %v418
      %v420 = vpop.f32.mrb[0].mxu0
      %421 = vdwg.mxu0
      %v422 = vmax.f32 %v419, 0.0
      %v423 = vmax.f32 %v342, %v422
      %s424 = scalar_lea.vmem %s246, 80
      %v425 = vld [vmem:[%s424] sm:$0xff]
      %v426 = vld [vmem:[%s424 + $0x8] sm:$0xff]
      %v427 = vld [vmem:[%s424 + $0x10] sm:$0xff]
      %v428 = vld [vmem:[%s424 + $0x18] sm:$0xff]
      %v429 = vld [vmem:[%s424 + $0x20] sm:$0xf]
      %v431 = vsel %vm268, %v429, 0
      %433 = vmatprep.subr.mxu0 0.0
      %434 = vmatpush1.msra.mxu0 %v425
      %435 = vmatprep.subr.mxu0 0.0
      %436 = vmatpush1.msra.mxu0 %v426
      %437 = vmatprep.subr.mxu0 0.0
      %438 = vmatpush1.msra.mxu0 %v427
      %439 = vmatprep.subr.mxu0 0.0
      %440 = vmatpush1.msra.mxu0 %v428
      %441 = vmatprep.subr.mxu0 0.0
      %442 = vmatpush1.msra.mxu0 %v431
      %443 = vmatprep.subr.mxu0 0.0
      %444 = vmatpush1.msra.mxu0 0.0
      %445 = vmatprep.subr.mxu0 0.0
      %446 = vmatpush1.msra.mxu0 0.0
      %447 = vmatprep.subr.mxu0 0.0
      %448 = vmatpush1.msra.mxu0 0.0
      %449 = vmatprep.subr.mxu0 0.0
      %450 = vmatpush1.msra.mxu0 0.0
      %451 = vmatprep.subr.mxu0 0.0
      %452 = vmatpush1.msra.mxu0 0.0
      %453 = vmatprep.subr.mxu0 0.0
      %454 = vmatpush1.msra.mxu0 0.0
      %455 = vmatprep.subr.mxu0 0.0
      %456 = vmatpush1.msra.mxu0 0.0
      %457 = vmatprep.subr.mxu0 0.0
      %458 = vmatpush1.msra.mxu0 0.0
      %459 = vmatprep.subr.mxu0 0.0
      %460 = vmatpush1.msra.mxu0 0.0
      %461 = vmatprep.subr.mxu0 0.0
      %462 = vmatpush1.msra.mxu0 0.0
      %463 = vmatprep.subr.mxu0 0.0
      %464 = vmatpush1.msra.mxu0 0.0
      %465 = vmatprep.subr.mxu0 0.0
      %466 = vmatpush1.msra.mxu0 0.0
      %467 = vmatprep.subr.mxu0 0.0
      %468 = vmatpush1.msra.mxu0 0.0
      %469 = vmatprep.subr.mxu0 0.0
      %470 = vmatpush1.msra.mxu0 0.0
      %471 = vmatprep.subr.mxu0 0.0
      %472 = vmatpush1.msra.mxu0 0.0
      %473 = vmatprep.subr.mxu0 0.0
      %474 = vmatpush1.msra.mxu0 0.0
      %475 = vmatprep.subr.mxu0 0.0
      %476 = vmatpush1.msra.mxu0 0.0
      %477 = vmatprep.subr.mxu0 0.0
      %478 = vmatpush1.msra.mxu0 0.0
      %479 = vmatprep.subr.mxu0 0.0
      %480 = vmatpush1.msra.mxu0 0.0
      %481 = vmatprep.subr.mxu0 0.0
      %482 = vmatpush1.msra.mxu0 0.0
      %483 = vmatprep.subr.mxu0 0.0
      %484 = vmatpush1.msra.mxu0 0.0
      %485 = vmatprep.subr.mxu0 0.0
      %486 = vmatpush1.msra.mxu0 0.0
      %487 = vmatprep.subr.mxu0 0.0
      %488 = vmatpush1.msra.mxu0 0.0
      %489 = vmatprep.subr.mxu0 0.0
      %490 = vmatpush1.msra.mxu0 0.0
      %491 = vmatprep.subr.mxu0 0.0
      %492 = vmatpush1.msra.mxu0 0.0
      %493 = vmatprep.subr.mxu0 0.0
      %494 = vmatpush1.msra.mxu0 0.0
      %495 = vmatprep.subr.mxu0 0.0
      %496 = vmatpush1.msra.mxu0 0.0
      %497 = vmatprep.mubr.f32.mxu0 0.0
      %498 = vmatmul.mubr.f32.gmra.mrb[0].mxu0 %v266
      %v499 = vpop.f32.mrb[0].mxu0
      %v500 = vadd.f32 %v262, %v499
      %v501 = vpop.f32.mrb[0].mxu0
      %502 = vdwg.mxu0
      %v503 = vmax.f32 %v500, 0.0
      %s504 = scalar_lea.vmem %s246, 120
      %v505 = vld [vmem:[%s504] sm:$0xff]
      %v506 = vld [vmem:[%s504 + $0x8] sm:$0xff]
      %v507 = vld [vmem:[%s504 + $0x10] sm:$0xff]
      %v508 = vld [vmem:[%s504 + $0x18] sm:$0xff]
      %v509 = vld [vmem:[%s504 + $0x20] sm:$0xf]
      %v511 = vsel %vm268, %v509, 0
      %513 = vmatprep.subr.mxu0 0.0
      %514 = vmatpush1.msra.mxu0 %v505
      %515 = vmatprep.subr.mxu0 0.0
      %516 = vmatpush1.msra.mxu0 %v506
      %517 = vmatprep.subr.mxu0 0.0
      %518 = vmatpush1.msra.mxu0 %v507
      %519 = vmatprep.subr.mxu0 0.0
      %520 = vmatpush1.msra.mxu0 %v508
      %521 = vmatprep.subr.mxu0 0.0
      %522 = vmatpush1.msra.mxu0 %v511
      %523 = vmatprep.subr.mxu0 0.0
      %524 = vmatpush1.msra.mxu0 0.0
      %525 = vmatprep.subr.mxu0 0.0
      %526 = vmatpush1.msra.mxu0 0.0
      %527 = vmatprep.subr.mxu0 0.0
      %528 = vmatpush1.msra.mxu0 0.0
      %529 = vmatprep.subr.mxu0 0.0
      %530 = vmatpush1.msra.mxu0 0.0
      %531 = vmatprep.subr.mxu0 0.0
      %532 = vmatpush1.msra.mxu0 0.0
      %533 = vmatprep.subr.mxu0 0.0
      %534 = vmatpush1.msra.mxu0 0.0
      %535 = vmatprep.subr.mxu0 0.0
      %536 = vmatpush1.msra.mxu0 0.0
      %537 = vmatprep.subr.mxu0 0.0
      %538 = vmatpush1.msra.mxu0 0.0
      %539 = vmatprep.subr.mxu0 0.0
      %540 = vmatpush1.msra.mxu0 0.0
      %541 = vmatprep.subr.mxu0 0.0
      %542 = vmatpush1.msra.mxu0 0.0
      %543 = vmatprep.subr.mxu0 0.0
      %544 = vmatpush1.msra.mxu0 0.0
      %545 = vmatprep.subr.mxu0 0.0
      %546 = vmatpush1.msra.mxu0 0.0
      %547 = vmatprep.subr.mxu0 0.0
      %548 = vmatpush1.msra.mxu0 0.0
      %549 = vmatprep.subr.mxu0 0.0
      %550 = vmatpush1.msra.mxu0 0.0
      %551 = vmatprep.subr.mxu0 0.0
      %552 = vmatpush1.msra.mxu0 0.0
      %553 = vmatprep.subr.mxu0 0.0
      %554 = vmatpush1.msra.mxu0 0.0
      %555 = vmatprep.subr.mxu0 0.0
      %556 = vmatpush1.msra.mxu0 0.0
      %557 = vmatprep.subr.mxu0 0.0
      %558 = vmatpush1.msra.mxu0 0.0
      %559 = vmatprep.subr.mxu0 0.0
      %560 = vmatpush1.msra.mxu0 0.0
      %561 = vmatprep.subr.mxu0 0.0
      %562 = vmatpush1.msra.mxu0 0.0
      %563 = vmatprep.subr.mxu0 0.0
      %564 = vmatpush1.msra.mxu0 0.0
      %565 = vmatprep.subr.mxu0 0.0
      %566 = vmatpush1.msra.mxu0 0.0
      %567 = vmatprep.subr.mxu0 0.0
      %568 = vmatpush1.msra.mxu0 0.0
      %569 = vmatprep.subr.mxu0 0.0
      %570 = vmatpush1.msra.mxu0 0.0
      %571 = vmatprep.subr.mxu0 0.0
      %572 = vmatpush1.msra.mxu0 0.0
      %573 = vmatprep.subr.mxu0 0.0
      %574 = vmatpush1.msra.mxu0 0.0
      %575 = vmatprep.subr.mxu0 0.0
      %576 = vmatpush1.msra.mxu0 0.0
      %577 = vmatprep.mubr.f32.mxu0 0.0
      %578 = vmatmul.mubr.f32.gmra.mrb[0].mxu0 %v266
      %v579 = vpop.f32.mrb[0].mxu0
      %v580 = vadd.f32 %v262, %v579
      %v581 = vpop.f32.mrb[0].mxu0
      %582 = vdwg.mxu0
      %v583 = vmax.f32 %v580, 0.0
      %v584 = vmax.f32 %v503, %v583
      %v585 = vmax.f32 %v423, %v584
      %v586 = vld [vmem:[%s3] sm:$0xff]
      %v587 = vld [vmem:[%s3 + $0x8] sm:$0xff]
      %v588 = vld [vmem:[%s3 + $0x10] sm:$0xff]
      %v589 = vld [vmem:[%s3 + $0x18] sm:$0xff]
      %v590 = vld [vmem:[%s3 + $0x20] sm:$0xff]
      %v591 = vld [vmem:[%s3 + $0x28] sm:$0xff]
      %v592 = vld [vmem:[%s3 + $0x30] sm:$0xff]
      %v593 = vld [vmem:[%s3 + $0x38] sm:$0xff]
      %vm594 = vcmask 523264
      %v596 = vsel %vm594, %v585, 0
      %598 = vmatprep.subr.mxu0 0.0
      %599 = vmatpush1.msra.mxu0 %v586
      %600 = vmatprep.subr.mxu0 0.0
      %601 = vmatpush1.msra.mxu0 %v587
      %602 = vmatprep.subr.mxu0 0.0
      %603 = vmatpush1.msra.mxu0 %v588
      %604 = vmatprep.subr.mxu0 0.0
      %605 = vmatpush1.msra.mxu0 %v589
      %606 = vmatprep.subr.mxu0 0.0
      %607 = vmatpush1.msra.mxu0 %v590
      %608 = vmatprep.subr.mxu0 0.0
      %609 = vmatpush1.msra.mxu0 %v591
      %610 = vmatprep.subr.mxu0 0.0
      %611 = vmatpush1.msra.mxu0 %v592
      %612 = vmatprep.subr.mxu0 0.0
      %613 = vmatpush1.msra.mxu0 %v593
      %614 = vmatprep.subr.mxu0 0.0
      %615 = vmatpush1.msra.mxu0 0.0
      %616 = vmatprep.subr.mxu0 0.0
      %617 = vmatpush1.msra.mxu0 0.0
      %618 = vmatprep.subr.mxu0 0.0
      %619 = vmatpush1.msra.mxu0 0.0
      %620 = vmatprep.subr.mxu0 0.0
      %621 = vmatpush1.msra.mxu0 0.0
      %622 = vmatprep.subr.mxu0 0.0
      %623 = vmatpush1.msra.mxu0 0.0
      %624 = vmatprep.subr.mxu0 0.0
      %625 = vmatpush1.msra.mxu0 0.0
      %626 = vmatprep.subr.mxu0 0.0
      %627 = vmatpush1.msra.mxu0 0.0
      %628 = vmatprep.subr.mxu0 0.0
      %629 = vmatpush1.msra.mxu0 0.0
      %630 = vmatprep.subr.mxu0 0.0
      %631 = vmatpush1.msra.mxu0 0.0
      %632 = vmatprep.subr.mxu0 0.0
      %633 = vmatpush1.msra.mxu0 0.0
      %634 = vmatprep.subr.mxu0 0.0
      %635 = vmatpush1.msra.mxu0 0.0
      %636 = vmatprep.subr.mxu0 0.0
      %637 = vmatpush1.msra.mxu0 0.0
      %638 = vmatprep.subr.mxu0 0.0
      %639 = vmatpush1.msra.mxu0 0.0
      %640 = vmatprep.subr.mxu0 0.0
      %641 = vmatpush1.msra.mxu0 0.0
      %642 = vmatprep.subr.mxu0 0.0
      %643 = vmatpush1.msra.mxu0 0.0
      %644 = vmatprep.subr.mxu0 0.0
      %645 = vmatpush1.msra.mxu0 0.0
      %646 = vmatprep.subr.mxu0 0.0
      %647 = vmatpush1.msra.mxu0 0.0
      %648 = vmatprep.subr.mxu0 0.0
      %649 = vmatpush1.msra.mxu0 0.0
      %650 = vmatprep.subr.mxu0 0.0
      %651 = vmatpush1.msra.mxu0 0.0
      %652 = vmatprep.subr.mxu0 0.0
      %653 = vmatpush1.msra.mxu0 0.0
      %654 = vmatprep.subr.mxu0 0.0
      %655 = vmatpush1.msra.mxu0 0.0
      %656 = vmatprep.subr.mxu0 0.0
      %657 = vmatpush1.msra.mxu0 0.0
      %658 = vmatprep.subr.mxu0 0.0
      %659 = vmatpush1.msra.mxu0 0.0
      %660 = vmatprep.subr.mxu0 0.0
      %661 = vmatpush1.msra.mxu0 0.0
      %662 = vmatprep.mubr.f32.mxu0 0.0
      %663 = vmatmul.mubr.f32.gmra.mrb[0].mxu0 %v596
      %v664 = vpop.f32.mrb[0].mxu0
      %v665 = vadd.f32 0.0, %v664
      %v666 = vpop.f32.mrb[0].mxu0
      %667 = vdwg.mxu0
      %s668 = scalar_lea.vmem %s3, 64
      %v669 = vld [vmem:[%s668] sm:$0xff]
      %v670 = vld [vmem:[%s668 + $0x8] sm:$0xff]
      %v671 = vld [vmem:[%s668 + $0x10] sm:$0xff]
      %v672 = vld [vmem:[%s668 + $0x18] sm:$0xff]
      %v673 = vld [vmem:[%s668 + $0x20] sm:$0xff]
      %v674 = vld [vmem:[%s668 + $0x28] sm:$0xff]
      %v675 = vld [vmem:[%s668 + $0x30] sm:$0xff]
      %v676 = vld [vmem:[%s668 + $0x38] sm:$0xff]
      %677 = vmatprep.subr.mxu0 0.0
      %678 = vmatpush1.msra.mxu0 %v669
      %679 = vmatprep.subr.mxu0 0.0
      %680 = vmatpush1.msra.mxu0 %v670
      %681 = vmatprep.subr.mxu0 0.0
      %682 = vmatpush1.msra.mxu0 %v671
      %683 = vmatprep.subr.mxu0 0.0
      %684 = vmatpush1.msra.mxu0 %v672
      %685 = vmatprep.subr.mxu0 0.0
      %686 = vmatpush1.msra.mxu0 %v673
      %687 = vmatprep.subr.mxu0 0.0
      %688 = vmatpush1.msra.mxu0 %v674
      %689 = vmatprep.subr.mxu0 0.0
      %690 = vmatpush1.msra.mxu0 %v675
      %691 = vmatprep.subr.mxu0 0.0
      %692 = vmatpush1.msra.mxu0 %v676
      %693 = vmatprep.subr.mxu0 0.0
      %694 = vmatpush1.msra.mxu0 0.0
      %695 = vmatprep.subr.mxu0 0.0
      %696 = vmatpush1.msra.mxu0 0.0
      %697 = vmatprep.subr.mxu0 0.0
      %698 = vmatpush1.msra.mxu0 0.0
      %699 = vmatprep.subr.mxu0 0.0
      %700 = vmatpush1.msra.mxu0 0.0
      %701 = vmatprep.subr.mxu0 0.0
      %702 = vmatpush1.msra.mxu0 0.0
      %703 = vmatprep.subr.mxu0 0.0
      %704 = vmatpush1.msra.mxu0 0.0
      %705 = vmatprep.subr.mxu0 0.0
      %706 = vmatpush1.msra.mxu0 0.0
      %707 = vmatprep.subr.mxu0 0.0
      %708 = vmatpush1.msra.mxu0 0.0
      %709 = vmatprep.subr.mxu0 0.0
      %710 = vmatpush1.msra.mxu0 0.0
      %711 = vmatprep.subr.mxu0 0.0
      %712 = vmatpush1.msra.mxu0 0.0
      %713 = vmatprep.subr.mxu0 0.0
      %714 = vmatpush1.msra.mxu0 0.0
      %715 = vmatprep.subr.mxu0 0.0
      %716 = vmatpush1.msra.mxu0 0.0
      %717 = vmatprep.subr.mxu0 0.0
      %718 = vmatpush1.msra.mxu0 0.0
      %719 = vmatprep.subr.mxu0 0.0
      %720 = vmatpush1.msra.mxu0 0.0
      %721 = vmatprep.subr.mxu0 0.0
      %722 = vmatpush1.msra.mxu0 0.0
      %723 = vmatprep.subr.mxu0 0.0
      %724 = vmatpush1.msra.mxu0 0.0
      %725 = vmatprep.subr.mxu0 0.0
      %726 = vmatpush1.msra.mxu0 0.0
      %727 = vmatprep.subr.mxu0 0.0
      %728 = vmatpush1.msra.mxu0 0.0
      %729 = vmatprep.subr.mxu0 0.0
      %730 = vmatpush1.msra.mxu0 0.0
      %731 = vmatprep.subr.mxu0 0.0
      %732 = vmatpush1.msra.mxu0 0.0
      %733 = vmatprep.subr.mxu0 0.0
      %734 = vmatpush1.msra.mxu0 0.0
      %735 = vmatprep.subr.mxu0 0.0
      %736 = vmatpush1.msra.mxu0 0.0
      %737 = vmatprep.subr.mxu0 0.0
      %738 = vmatpush1.msra.mxu0 0.0
      %739 = vmatprep.subr.mxu0 0.0
      %740 = vmatpush1.msra.mxu0 0.0
      %741 = vmatprep.mubr.f32.mxu0 0.0
      %742 = vmatmul.mubr.f32.gmra.mrb[0].mxu0 %v596
      %v743 = vpop.f32.mrb[0].mxu0
      %v744 = vadd.f32 0.0, %v743
      %v745 = vpop.f32.mrb[0].mxu0
      %746 = vdwg.mxu0
      %s747 = scalar_lea.vmem %s3, 128
      %v748 = vld [vmem:[%s747] sm:$0xff]
      %v749 = vld [vmem:[%s747 + $0x8] sm:$0xff]
      %v750 = vld [vmem:[%s747 + $0x10] sm:$0xff]
      %v751 = vld [vmem:[%s747 + $0x18] sm:$0xff]
      %v752 = vld [vmem:[%s747 + $0x20] sm:$0xff]
      %v753 = vld [vmem:[%s747 + $0x28] sm:$0xff]
      %v754 = vld [vmem:[%s747 + $0x30] sm:$0xff]
      %v755 = vld [vmem:[%s747 + $0x38] sm:$0xff]
      %756 = vmatprep.subr.mxu0 0.0
      %757 = vmatpush1.msra.mxu0 %v748
      %758 = vmatprep.subr.mxu0 0.0
      %759 = vmatpush1.msra.mxu0 %v749
      %760 = vmatprep.subr.mxu0 0.0
      %761 = vmatpush1.msra.mxu0 %v750
      %762 = vmatprep.subr.mxu0 0.0
      %763 = vmatpush1.msra.mxu0 %v751
      %764 = vmatprep.subr.mxu0 0.0
      %765 = vmatpush1.msra.mxu0 %v752
      %766 = vmatprep.subr.mxu0 0.0
      %767 = vmatpush1.msra.mxu0 %v753
      %768 = vmatprep.subr.mxu0 0.0
      %769 = vmatpush1.msra.mxu0 %v754
      %770 = vmatprep.subr.mxu0 0.0
      %771 = vmatpush1.msra.mxu0 %v755
      %772 = vmatprep.subr.mxu0 0.0
      %773 = vmatpush1.msra.mxu0 0.0
      %774 = vmatprep.subr.mxu0 0.0
      %775 = vmatpush1.msra.mxu0 0.0
      %776 = vmatprep.subr.mxu0 0.0
      %777 = vmatpush1.msra.mxu0 0.0
      %778 = vmatprep.subr.mxu0 0.0
      %779 = vmatpush1.msra.mxu0 0.0
      %780 = vmatprep.subr.mxu0 0.0
      %781 = vmatpush1.msra.mxu0 0.0
      %782 = vmatprep.subr.mxu0 0.0
      %783 = vmatpush1.msra.mxu0 0.0
      %784 = vmatprep.subr.mxu0 0.0
      %785 = vmatpush1.msra.mxu0 0.0
      %786 = vmatprep.subr.mxu0 0.0
      %787 = vmatpush1.msra.mxu0 0.0
      %788 = vmatprep.subr.mxu0 0.0
      %789 = vmatpush1.msra.mxu0 0.0
      %790 = vmatprep.subr.mxu0 0.0
      %791 = vmatpush1.msra.mxu0 0.0
      %792 = vmatprep.subr.mxu0 0.0
      %793 = vmatpush1.msra.mxu0 0.0
      %794 = vmatprep.subr.mxu0 0.0
      %795 = vmatpush1.msra.mxu0 0.0
      %796 = vmatprep.subr.mxu0 0.0
      %797 = vmatpush1.msra.mxu0 0.0
      %798 = vmatprep.subr.mxu0 0.0
      %799 = vmatpush1.msra.mxu0 0.0
      %800 = vmatprep.subr.mxu0 0.0
      %801 = vmatpush1.msra.mxu0 0.0
      %802 = vmatprep.subr.mxu0 0.0
      %803 = vmatpush1.msra.mxu0 0.0
      %804 = vmatprep.subr.mxu0 0.0
      %805 = vmatpush1.msra.mxu0 0.0
      %806 = vmatprep.subr.mxu0 0.0
      %807 = vmatpush1.msra.mxu0 0.0
      %808 = vmatprep.subr.mxu0 0.0
      %809 = vmatpush1.msra.mxu0 0.0
      %810 = vmatprep.subr.mxu0 0.0
      %811 = vmatpush1.msra.mxu0 0.0
      %812 = vmatprep.subr.mxu0 0.0
      %813 = vmatpush1.msra.mxu0 0.0
      %814 = vmatprep.subr.mxu0 0.0
      %815 = vmatpush1.msra.mxu0 0.0
      %816 = vmatprep.subr.mxu0 0.0
      %817 = vmatpush1.msra.mxu0 0.0
      %818 = vmatprep.subr.mxu0 0.0
      %819 = vmatpush1.msra.mxu0 0.0
      %820 = vmatprep.mubr.f32.mxu0 0.0
      %821 = vmatmul.mubr.f32.gmra.mrb[0].mxu0 %v596
      %v822 = vpop.f32.mrb[0].mxu0
      %v823 = vadd.f32 0.0, %v822
      %v824 = vpop.f32.mrb[0].mxu0
      %825 = vdwg.mxu0
      %s826 = scalar_lea.vmem %s3, 192
      %v827 = vld [vmem:[%s826] sm:$0xff]
      %v828 = vld [vmem:[%s826 + $0x8] sm:$0xff]
      %v829 = vld [vmem:[%s826 + $0x10] sm:$0xff]
      %v830 = vld [vmem:[%s826 + $0x18] sm:$0xff]
      %v831 = vld [vmem:[%s826 + $0x20] sm:$0xff]
      %v832 = vld [vmem:[%s826 + $0x28] sm:$0xff]
      %v833 = vld [vmem:[%s826 + $0x30] sm:$0xff]
      %v834 = vld [vmem:[%s826 + $0x38] sm:$0xff]
      %835 = vmatprep.subr.mxu0 0.0
      %836 = vmatpush1.msra.mxu0 %v827
      %837 = vmatprep.subr.mxu0 0.0
      %838 = vmatpush1.msra.mxu0 %v828
      %839 = vmatprep.subr.mxu0 0.0
      %840 = vmatpush1.msra.mxu0 %v829
      %841 = vmatprep.subr.mxu0 0.0
      %842 = vmatpush1.msra.mxu0 %v830
      %843 = vmatprep.subr.mxu0 0.0
      %844 = vmatpush1.msra.mxu0 %v831
      %845 = vmatprep.subr.mxu0 0.0
      %846 = vmatpush1.msra.mxu0 %v832
      %847 = vmatprep.subr.mxu0 0.0
      %848 = vmatpush1.msra.mxu0 %v833
      %849 = vmatprep.subr.mxu0 0.0
      %850 = vmatpush1.msra.mxu0 %v834
      %851 = vmatprep.subr.mxu0 0.0
      %852 = vmatpush1.msra.mxu0 0.0
      %853 = vmatprep.subr.mxu0 0.0
      %854 = vmatpush1.msra.mxu0 0.0
      %855 = vmatprep.subr.mxu0 0.0
      %856 = vmatpush1.msra.mxu0 0.0
      %857 = vmatprep.subr.mxu0 0.0
      %858 = vmatpush1.msra.mxu0 0.0
      %859 = vmatprep.subr.mxu0 0.0
      %860 = vmatpush1.msra.mxu0 0.0
      %861 = vmatprep.subr.mxu0 0.0
      %862 = vmatpush1.msra.mxu0 0.0
      %863 = vmatprep.subr.mxu0 0.0
      %864 = vmatpush1.msra.mxu0 0.0
      %865 = vmatprep.subr.mxu0 0.0
      %866 = vmatpush1.msra.mxu0 0.0
      %867 = vmatprep.subr.mxu0 0.0
      %868 = vmatpush1.msra.mxu0 0.0
      %869 = vmatprep.subr.mxu0 0.0
      %870 = vmatpush1.msra.mxu0 0.0
      %871 = vmatprep.subr.mxu0 0.0
      %872 = vmatpush1.msra.mxu0 0.0
      %873 = vmatprep.subr.mxu0 0.0
      %874 = vmatpush1.msra.mxu0 0.0
      %875 = vmatprep.subr.mxu0 0.0
      %876 = vmatpush1.msra.mxu0 0.0
      %877 = vmatprep.subr.mxu0 0.0
      %878 = vmatpush1.msra.mxu0 0.0
      %879 = vmatprep.subr.mxu0 0.0
      %880 = vmatpush1.msra.mxu0 0.0
      %881 = vmatprep.subr.mxu0 0.0
      %882 = vmatpush1.msra.mxu0 0.0
      %883 = vmatprep.subr.mxu0 0.0
      %884 = vmatpush1.msra.mxu0 0.0
      %885 = vmatprep.subr.mxu0 0.0
      %886 = vmatpush1.msra.mxu0 0.0
      %887 = vmatprep.subr.mxu0 0.0
      %888 = vmatpush1.msra.mxu0 0.0
      %889 = vmatprep.subr.mxu0 0.0
      %890 = vmatpush1.msra.mxu0 0.0
      %891 = vmatprep.subr.mxu0 0.0
      %892 = vmatpush1.msra.mxu0 0.0
      %893 = vmatprep.subr.mxu0 0.0
      %894 = vmatpush1.msra.mxu0 0.0
      %895 = vmatprep.subr.mxu0 0.0
      %896 = vmatpush1.msra.mxu0 0.0
      %897 = vmatprep.subr.mxu0 0.0
      %898 = vmatpush1.msra.mxu0 0.0
      %899 = vmatprep.mubr.f32.mxu0 0.0
      %900 = vmatmul.mubr.f32.gmra.mrb[0].mxu0 %v596
      %v901 = vpop.f32.mrb[0].mxu0
      %v902 = vadd.f32 0.0, %v901
      %v903 = vpop.f32.mrb[0].mxu0
      %904 = vdwg.mxu0
      %s905 = scalar_lea.vmem %s3, 256
      %v906 = vld [vmem:[%s905] sm:$0xff]
      %v907 = vld [vmem:[%s905 + $0x8] sm:$0xff]
      %v908 = vld [vmem:[%s905 + $0x10] sm:$0xff]
      %v909 = vld [vmem:[%s905 + $0x18] sm:$0xff]
      %v910 = vld [vmem:[%s905 + $0x20] sm:$0xff]
      %v911 = vld [vmem:[%s905 + $0x28] sm:$0xff]
      %v912 = vld [vmem:[%s905 + $0x30] sm:$0xff]
      %v913 = vld [vmem:[%s905 + $0x38] sm:$0xff]
      %914 = vmatprep.subr.mxu0 0.0
      %915 = vmatpush1.msra.mxu0 %v906
      %916 = vmatprep.subr.mxu0 0.0
      %917 = vmatpush1.msra.mxu0 %v907
      %918 = vmatprep.subr.mxu0 0.0
      %919 = vmatpush1.msra.mxu0 %v908
      %920 = vmatprep.subr.mxu0 0.0
      %921 = vmatpush1.msra.mxu0 %v909
      %922 = vmatprep.subr.mxu0 0.0
      %923 = vmatpush1.msra.mxu0 %v910
      %924 = vmatprep.subr.mxu0 0.0
      %925 = vmatpush1.msra.mxu0 %v911
      %926 = vmatprep.subr.mxu0 0.0
      %927 = vmatpush1.msra.mxu0 %v912
      %928 = vmatprep.subr.mxu0 0.0
      %929 = vmatpush1.msra.mxu0 %v913
      %930 = vmatprep.subr.mxu0 0.0
      %931 = vmatpush1.msra.mxu0 0.0
      %932 = vmatprep.subr.mxu0 0.0
      %933 = vmatpush1.msra.mxu0 0.0
      %934 = vmatprep.subr.mxu0 0.0
      %935 = vmatpush1.msra.mxu0 0.0
      %936 = vmatprep.subr.mxu0 0.0
      %937 = vmatpush1.msra.mxu0 0.0
      %938 = vmatprep.subr.mxu0 0.0
      %939 = vmatpush1.msra.mxu0 0.0
      %940 = vmatprep.subr.mxu0 0.0
      %941 = vmatpush1.msra.mxu0 0.0
      %942 = vmatprep.subr.mxu0 0.0
      %943 = vmatpush1.msra.mxu0 0.0
      %944 = vmatprep.subr.mxu0 0.0
      %945 = vmatpush1.msra.mxu0 0.0
      %946 = vmatprep.subr.mxu0 0.0
      %947 = vmatpush1.msra.mxu0 0.0
      %948 = vmatprep.subr.mxu0 0.0
      %949 = vmatpush1.msra.mxu0 0.0
      %950 = vmatprep.subr.mxu0 0.0
      %951 = vmatpush1.msra.mxu0 0.0
      %952 = vmatprep.subr.mxu0 0.0
      %953 = vmatpush1.msra.mxu0 0.0
      %954 = vmatprep.subr.mxu0 0.0
      %955 = vmatpush1.msra.mxu0 0.0
      %956 = vmatprep.subr.mxu0 0.0
      %957 = vmatpush1.msra.mxu0 0.0
      %958 = vmatprep.subr.mxu0 0.0
      %959 = vmatpush1.msra.mxu0 0.0
      %960 = vmatprep.subr.mxu0 0.0
      %961 = vmatpush1.msra.mxu0 0.0
      %962 = vmatprep.subr.mxu0 0.0
      %963 = vmatpush1.msra.mxu0 0.0
      %964 = vmatprep.subr.mxu0 0.0
      %965 = vmatpush1.msra.mxu0 0.0
      %966 = vmatprep.subr.mxu0 0.0
      %967 = vmatpush1.msra.mxu0 0.0
      %968 = vmatprep.subr.mxu0 0.0
      %969 = vmatpush1.msra.mxu0 0.0
      %970 = vmatprep.subr.mxu0 0.0
      %971 = vmatpush1.msra.mxu0 0.0
      %972 = vmatprep.subr.mxu0 0.0
      %973 = vmatpush1.msra.mxu0 0.0
      %974 = vmatprep.subr.mxu0 0.0
      %975 = vmatpush1.msra.mxu0 0.0
      %976 = vmatprep.subr.mxu0 0.0
      %977 = vmatpush1.msra.mxu0 0.0
      %978 = vmatprep.mubr.f32.mxu0 0.0
      %979 = vmatmul.mubr.f32.gmra.mrb[0].mxu0 %v596
      %v980 = vpop.f32.mrb[0].mxu0
      %v981 = vadd.f32 0.0, %v980
      %v982 = vpop.f32.mrb[0].mxu0
      %983 = vdwg.mxu0
      %s984 = scalar_lea.vmem %s3, 320
      %v985 = vld [vmem:[%s984] sm:$0xff]
      %v986 = vld [vmem:[%s984 + $0x8] sm:$0xff]
      %v987 = vld [vmem:[%s984 + $0x10] sm:$0xff]
      %v988 = vld [vmem:[%s984 + $0x18] sm:$0xff]
      %v989 = vld [vmem:[%s984 + $0x20] sm:$0xff]
      %v990 = vld [vmem:[%s984 + $0x28] sm:$0xff]
      %v991 = vld [vmem:[%s984 + $0x30] sm:$0xff]
      %v992 = vld [vmem:[%s984 + $0x38] sm:$0xff]
      %993 = vmatprep.subr.mxu0 0.0
      %994 = vmatpush1.msra.mxu0 %v985
      %995 = vmatprep.subr.mxu0 0.0
      %996 = vmatpush1.msra.mxu0 %v986
      %997 = vmatprep.subr.mxu0 0.0
      %998 = vmatpush1.msra.mxu0 %v987
      %999 = vmatprep.subr.mxu0 0.0
      %1000 = vmatpush1.msra.mxu0 %v988
      %1001 = vmatprep.subr.mxu0 0.0
      %1002 = vmatpush1.msra.mxu0 %v989
      %1003 = vmatprep.subr.mxu0 0.0
      %1004 = vmatpush1.msra.mxu0 %v990
      %1005 = vmatprep.subr.mxu0 0.0
      %1006 = vmatpush1.msra.mxu0 %v991
      %1007 = vmatprep.subr.mxu0 0.0
      %1008 = vmatpush1.msra.mxu0 %v992
      %1009 = vmatprep.subr.mxu0 0.0
      %1010 = vmatpush1.msra.mxu0 0.0
      %1011 = vmatprep.subr.mxu0 0.0
      %1012 = vmatpush1.msra.mxu0 0.0
      %1013 = vmatprep.subr.mxu0 0.0
      %1014 = vmatpush1.msra.mxu0 0.0
      %1015 = vmatprep.subr.mxu0 0.0
      %1016 = vmatpush1.msra.mxu0 0.0
      %1017 = vmatprep.subr.mxu0 0.0
      %1018 = vmatpush1.msra.mxu0 0.0
      %1019 = vmatprep.subr.mxu0 0.0
      %1020 = vmatpush1.msra.mxu0 0.0
      %1021 = vmatprep.subr.mxu0 0.0
      %1022 = vmatpush1.msra.mxu0 0.0
      %1023 = vmatprep.subr.mxu0 0.0
      %1024 = vmatpush1.msra.mxu0 0.0
      %1025 = vmatprep.subr.mxu0 0.0
      %1026 = vmatpush1.msra.mxu0 0.0
      %1027 = vmatprep.subr.mxu0 0.0
      %1028 = vmatpush1.msra.mxu0 0.0
      %1029 = vmatprep.subr.mxu0 0.0
      %1030 = vmatpush1.msra.mxu0 0.0
      %1031 = vmatprep.subr.mxu0 0.0
      %1032 = vmatpush1.msra.mxu0 0.0
      %1033 = vmatprep.subr.mxu0 0.0
      %1034 = vmatpush1.msra.mxu0 0.0
      %1035 = vmatprep.subr.mxu0 0.0
      %1036 = vmatpush1.msra.mxu0 0.0
      %1037 = vmatprep.subr.mxu0 0.0
      %1038 = vmatpush1.msra.mxu0 0.0
      %1039 = vmatprep.subr.mxu0 0.0
      %1040 = vmatpush1.msra.mxu0 0.0
      %1041 = vmatprep.subr.mxu0 0.0
      %1042 = vmatpush1.msra.mxu0 0.0
      %1043 = vmatprep.subr.mxu0 0.0
      %1044 = vmatpush1.msra.mxu0 0.0
      %1045 = vmatprep.subr.mxu0 0.0
      %1046 = vmatpush1.msra.mxu0 0.0
      %1047 = vmatprep.subr.mxu0 0.0
      %1048 = vmatpush1.msra.mxu0 0.0
      %1049 = vmatprep.subr.mxu0 0.0
      %1050 = vmatpush1.msra.mxu0 0.0
      %1051 = vmatprep.subr.mxu0 0.0
      %1052 = vmatpush1.msra.mxu0 0.0
      %1053 = vmatprep.subr.mxu0 0.0
      %1054 = vmatpush1.msra.mxu0 0.0
      %1055 = vmatprep.subr.mxu0 0.0
      %1056 = vmatpush1.msra.mxu0 0.0
      %1057 = vmatprep.mubr.f32.mxu0 0.0
      %1058 = vmatmul.mubr.f32.gmra.mrb[0].mxu0 %v596
      %v1059 = vpop.f32.mrb[0].mxu0
      %v1060 = vadd.f32 0.0, %v1059
      %v1061 = vpop.f32.mrb[0].mxu0
      %1062 = vdwg.mxu0
      %s1063 = scalar_lea.vmem %s3, 384
      %v1064 = vld [vmem:[%s1063] sm:$0xff]
      %v1065 = vld [vmem:[%s1063 + $0x8] sm:$0xff]
      %v1066 = vld [vmem:[%s1063 + $0x10] sm:$0xff]
      %v1067 = vld [vmem:[%s1063 + $0x18] sm:$0xff]
      %v1068 = vld [vmem:[%s1063 + $0x20] sm:$0xff]
      %v1069 = vld [vmem:[%s1063 + $0x28] sm:$0xff]
      %v1070 = vld [vmem:[%s1063 + $0x30] sm:$0xff]
      %v1071 = vld [vmem:[%s1063 + $0x38] sm:$0xff]
      %1072 = vmatprep.subr.mxu0 0.0
      %1073 = vmatpush1.msra.mxu0 %v1064
      %1074 = vmatprep.subr.mxu0 0.0
      %1075 = vmatpush1.msra.mxu0 %v1065
      %1076 = vmatprep.subr.mxu0 0.0
      %1077 = vmatpush1.msra.mxu0 %v1066
      %1078 = vmatprep.subr.mxu0 0.0
      %1079 = vmatpush1.msra.mxu0 %v1067
      %1080 = vmatprep.subr.mxu0 0.0
      %1081 = vmatpush1.msra.mxu0 %v1068
      %1082 = vmatprep.subr.mxu0 0.0
      %1083 = vmatpush1.msra.mxu0 %v1069
      %1084 = vmatprep.subr.mxu0 0.0
      %1085 = vmatpush1.msra.mxu0 %v1070
      %1086 = vmatprep.subr.mxu0 0.0
      %1087 = vmatpush1.msra.mxu0 %v1071
      %1088 = vmatprep.subr.mxu0 0.0
      %1089 = vmatpush1.msra.mxu0 0.0
      %1090 = vmatprep.subr.mxu0 0.0
      %1091 = vmatpush1.msra.mxu0 0.0
      %1092 = vmatprep.subr.mxu0 0.0
      %1093 = vmatpush1.msra.mxu0 0.0
      %1094 = vmatprep.subr.mxu0 0.0
      %1095 = vmatpush1.msra.mxu0 0.0
      %1096 = vmatprep.subr.mxu0 0.0
      %1097 = vmatpush1.msra.mxu0 0.0
      %1098 = vmatprep.subr.mxu0 0.0
      %1099 = vmatpush1.msra.mxu0 0.0
      %1100 = vmatprep.subr.mxu0 0.0
      %1101 = vmatpush1.msra.mxu0 0.0
      %1102 = vmatprep.subr.mxu0 0.0
      %1103 = vmatpush1.msra.mxu0 0.0
      %1104 = vmatprep.subr.mxu0 0.0
      %1105 = vmatpush1.msra.mxu0 0.0
      %1106 = vmatprep.subr.mxu0 0.0
      %1107 = vmatpush1.msra.mxu0 0.0
      %1108 = vmatprep.subr.mxu0 0.0
      %1109 = vmatpush1.msra.mxu0 0.0
      %1110 = vmatprep.subr.mxu0 0.0
      %1111 = vmatpush1.msra.mxu0 0.0
      %1112 = vmatprep.subr.mxu0 0.0
      %1113 = vmatpush1.msra.mxu0 0.0
      %1114 = vmatprep.subr.mxu0 0.0
      %1115 = vmatpush1.msra.mxu0 0.0
      %1116 = vmatprep.subr.mxu0 0.0
      %1117 = vmatpush1.msra.mxu0 0.0
      %1118 = vmatprep.subr.mxu0 0.0
      %1119 = vmatpush1.msra.mxu0 0.0
      %1120 = vmatprep.subr.mxu0 0.0
      %1121 = vmatpush1.msra.mxu0 0.0
      %1122 = vmatprep.subr.mxu0 0.0
      %1123 = vmatpush1.msra.mxu0 0.0
      %1124 = vmatprep.subr.mxu0 0.0
      %1125 = vmatpush1.msra.mxu0 0.0
      %1126 = vmatprep.subr.mxu0 0.0
      %1127 = vmatpush1.msra.mxu0 0.0
      %1128 = vmatprep.subr.mxu0 0.0
      %1129 = vmatpush1.msra.mxu0 0.0
      %1130 = vmatprep.subr.mxu0 0.0
      %1131 = vmatpush1.msra.mxu0 0.0
      %1132 = vmatprep.subr.mxu0 0.0
      %1133 = vmatpush1.msra.mxu0 0.0
      %1134 = vmatprep.subr.mxu0 0.0
      %1135 = vmatpush1.msra.mxu0 0.0
      %1136 = vmatprep.mubr.f32.mxu0 0.0
      %1137 = vmatmul.mubr.f32.gmra.mrb[0].mxu0 %v596
      %v1138 = vpop.f32.mrb[0].mxu0
      %v1139 = vadd.f32 0.0, %v1138
      %v1140 = vpop.f32.mrb[0].mxu0
      %1141 = vdwg.mxu0
      %s1142 = scalar_lea.vmem %s3, 448
      %v1143 = vld [vmem:[%s1142] sm:$0xff]
      %v1144 = vld [vmem:[%s1142 + $0x8] sm:$0xff]
      %v1145 = vld [vmem:[%s1142 + $0x10] sm:$0xff]
      %v1146 = vld [vmem:[%s1142 + $0x18] sm:$0xff]
      %v1147 = vld [vmem:[%s1142 + $0x20] sm:$0xff]
      %v1148 = vld [vmem:[%s1142 + $0x28] sm:$0xff]
      %v1149 = vld [vmem:[%s1142 + $0x30] sm:$0xff]
      %v1150 = vld [vmem:[%s1142 + $0x38] sm:$0xff]
      %1151 = vmatprep.subr.mxu0 0.0
      %1152 = vmatpush1.msra.mxu0 %v1143
      %1153 = vmatprep.subr.mxu0 0.0
      %1154 = vmatpush1.msra.mxu0 %v1144
      %1155 = vmatprep.subr.mxu0 0.0
      %1156 = vmatpush1.msra.mxu0 %v1145
      %1157 = vmatprep.subr.mxu0 0.0
      %1158 = vmatpush1.msra.mxu0 %v1146
      %1159 = vmatprep.subr.mxu0 0.0
      %1160 = vmatpush1.msra.mxu0 %v1147
      %1161 = vmatprep.subr.mxu0 0.0
      %1162 = vmatpush1.msra.mxu0 %v1148
      %1163 = vmatprep.subr.mxu0 0.0
      %1164 = vmatpush1.msra.mxu0 %v1149
      %1165 = vmatprep.subr.mxu0 0.0
      %1166 = vmatpush1.msra.mxu0 %v1150
      %1167 = vmatprep.subr.mxu0 0.0
      %1168 = vmatpush1.msra.mxu0 0.0
      %1169 = vmatprep.subr.mxu0 0.0
      %1170 = vmatpush1.msra.mxu0 0.0
      %1171 = vmatprep.subr.mxu0 0.0
      %1172 = vmatpush1.msra.mxu0 0.0
      %1173 = vmatprep.subr.mxu0 0.0
      %1174 = vmatpush1.msra.mxu0 0.0
      %1175 = vmatprep.subr.mxu0 0.0
      %1176 = vmatpush1.msra.mxu0 0.0
      %1177 = vmatprep.subr.mxu0 0.0
      %1178 = vmatpush1.msra.mxu0 0.0
      %1179 = vmatprep.subr.mxu0 0.0
      %1180 = vmatpush1.msra.mxu0 0.0
      %1181 = vmatprep.subr.mxu0 0.0
      %1182 = vmatpush1.msra.mxu0 0.0
      %1183 = vmatprep.subr.mxu0 0.0
      %1184 = vmatpush1.msra.mxu0 0.0
      %1185 = vmatprep.subr.mxu0 0.0
      %1186 = vmatpush1.msra.mxu0 0.0
      %1187 = vmatprep.subr.mxu0 0.0
      %1188 = vmatpush1.msra.mxu0 0.0
      %1189 = vmatprep.subr.mxu0 0.0
      %1190 = vmatpush1.msra.mxu0 0.0
      %1191 = vmatprep.subr.mxu0 0.0
      %1192 = vmatpush1.msra.mxu0 0.0
      %1193 = vmatprep.subr.mxu0 0.0
      %1194 = vmatpush1.msra.mxu0 0.0
      %1195 = vmatprep.subr.mxu0 0.0
      %1196 = vmatpush1.msra.mxu0 0.0
      %1197 = vmatprep.subr.mxu0 0.0
      %1198 = vmatpush1.msra.mxu0 0.0
      %1199 = vmatprep.subr.mxu0 0.0
      %1200 = vmatpush1.msra.mxu0 0.0
      %1201 = vmatprep.subr.mxu0 0.0
      %1202 = vmatpush1.msra.mxu0 0.0
      %1203 = vmatprep.subr.mxu0 0.0
      %1204 = vmatpush1.msra.mxu0 0.0
      %1205 = vmatprep.subr.mxu0 0.0
      %1206 = vmatpush1.msra.mxu0 0.0
      %1207 = vmatprep.subr.mxu0 0.0
      %1208 = vmatpush1.msra.mxu0 0.0
      %1209 = vmatprep.subr.mxu0 0.0
      %1210 = vmatpush1.msra.mxu0 0.0
      %1211 = vmatprep.subr.mxu0 0.0
      %1212 = vmatpush1.msra.mxu0 0.0
      %1213 = vmatprep.subr.mxu0 0.0
      %1214 = vmatpush1.msra.mxu0 0.0
      %1215 = vmatprep.mubr.f32.mxu0 0.0
      %1216 = vmatmul.mubr.f32.gmra.mrb[0].mxu0 %v596
      %v1217 = vpop.f32.mrb[0].mxu0
      %v1218 = vadd.f32 0.0, %v1217
      %v1219 = vpop.f32.mrb[0].mxu0
      %1220 = vdwg.mxu0
      %s1221 = scalar_lea.vmem %s3, 512
      %v1222 = vld [vmem:[%s1221] sm:$0xff]
      %v1223 = vld [vmem:[%s1221 + $0x8] sm:$0xff]
      %v1224 = vld [vmem:[%s1221 + $0x10] sm:$0xff]
      %v1225 = vld [vmem:[%s1221 + $0x18] sm:$0xff]
      %v1226 = vld [vmem:[%s1221 + $0x20] sm:$0xff]
      %v1227 = vld [vmem:[%s1221 + $0x28] sm:$0xff]
      %v1228 = vld [vmem:[%s1221 + $0x30] sm:$0xff]
      %v1229 = vld [vmem:[%s1221 + $0x38] sm:$0xff]
      %1230 = vmatprep.subr.mxu0 0.0
      %1231 = vmatpush1.msra.mxu0 %v1222
      %1232 = vmatprep.subr.mxu0 0.0
      %1233 = vmatpush1.msra.mxu0 %v1223
      %1234 = vmatprep.subr.mxu0 0.0
      %1235 = vmatpush1.msra.mxu0 %v1224
      %1236 = vmatprep.subr.mxu0 0.0
      %1237 = vmatpush1.msra.mxu0 %v1225
      %1238 = vmatprep.subr.mxu0 0.0
      %1239 = vmatpush1.msra.mxu0 %v1226
      %1240 = vmatprep.subr.mxu0 0.0
      %1241 = vmatpush1.msra.mxu0 %v1227
      %1242 = vmatprep.subr.mxu0 0.0
      %1243 = vmatpush1.msra.mxu0 %v1228
      %1244 = vmatprep.subr.mxu0 0.0
      %1245 = vmatpush1.msra.mxu0 %v1229
      %1246 = vmatprep.subr.mxu0 0.0
      %1247 = vmatpush1.msra.mxu0 0.0
      %1248 = vmatprep.subr.mxu0 0.0
      %1249 = vmatpush1.msra.mxu0 0.0
      %1250 = vmatprep.subr.mxu0 0.0
      %1251 = vmatpush1.msra.mxu0 0.0
      %1252 = vmatprep.subr.mxu0 0.0
      %1253 = vmatpush1.msra.mxu0 0.0
      %1254 = vmatprep.subr.mxu0 0.0
      %1255 = vmatpush1.msra.mxu0 0.0
      %1256 = vmatprep.subr.mxu0 0.0
      %1257 = vmatpush1.msra.mxu0 0.0
      %1258 = vmatprep.subr.mxu0 0.0
      %1259 = vmatpush1.msra.mxu0 0.0
      %1260 = vmatprep.subr.mxu0 0.0
      %1261 = vmatpush1.msra.mxu0 0.0
      %1262 = vmatprep.subr.mxu0 0.0
      %1263 = vmatpush1.msra.mxu0 0.0
      %1264 = vmatprep.subr.mxu0 0.0
      %1265 = vmatpush1.msra.mxu0 0.0
      %1266 = vmatprep.subr.mxu0 0.0
      %1267 = vmatpush1.msra.mxu0 0.0
      %1268 = vmatprep.subr.mxu0 0.0
      %1269 = vmatpush1.msra.mxu0 0.0
      %1270 = vmatprep.subr.mxu0 0.0
      %1271 = vmatpush1.msra.mxu0 0.0
      %1272 = vmatprep.subr.mxu0 0.0
      %1273 = vmatpush1.msra.mxu0 0.0
      %1274 = vmatprep.subr.mxu0 0.0
      %1275 = vmatpush1.msra.mxu0 0.0
      %1276 = vmatprep.subr.mxu0 0.0
      %1277 = vmatpush1.msra.mxu0 0.0
      %1278 = vmatprep.subr.mxu0 0.0
      %1279 = vmatpush1.msra.mxu0 0.0
      %1280 = vmatprep.subr.mxu0 0.0
      %1281 = vmatpush1.msra.mxu0 0.0
      %1282 = vmatprep.subr.mxu0 0.0
      %1283 = vmatpush1.msra.mxu0 0.0
      %1284 = vmatprep.subr.mxu0 0.0
      %1285 = vmatpush1.msra.mxu0 0.0
      %1286 = vmatprep.subr.mxu0 0.0
      %1287 = vmatpush1.msra.mxu0 0.0
      %1288 = vmatprep.subr.mxu0 0.0
      %1289 = vmatpush1.msra.mxu0 0.0
      %1290 = vmatprep.subr.mxu0 0.0
      %1291 = vmatpush1.msra.mxu0 0.0
      %1292 = vmatprep.subr.mxu0 0.0
      %1293 = vmatpush1.msra.mxu0 0.0
      %1294 = vmatprep.mubr.f32.mxu0 0.0
      %1295 = vmatmul.mubr.f32.gmra.mrb[0].mxu0 %v596
      %v1296 = vpop.f32.mrb[0].mxu0
      %v1297 = vadd.f32 0.0, %v1296
      %v1298 = vpop.f32.mrb[0].mxu0
      %1299 = vdwg.mxu0
      %v1300 = vld [vmem:[%s4] sm:$0xff]
      %v1301 = vld [vmem:[%s4 + $0x8] sm:$0xff]
      %v1302 = vld [vmem:[%s5] sm:$0xff]
      %v1303 = vld [vmem:[%s5 + $0x8] sm:$0xff]
      %1305 = vset.pattern.permute.xlu0 0
      %1306 = vperm.xlu0 %1305, %v1302
      %v1307 = vpop.permute.xlu0 %1306
      %1310 = vset.pattern.permute.xlu0 0
      %1311 = vperm.xlu0 %1310, %v1303
      %v1312 = vpop.permute.xlu0 %1311
      %vm1314 = vcmask 588800
      %v1316 = vsel %vm1314, %v1300, 0
      %v1319 = vsel %vm1314, %v1301, 0
      %1321 = vmatprep.subr.mxu0 0.0
      %1322 = vmatpush1.msra.mxu0 %v665
      %1323 = vmatprep.subr.mxu0 0.0
      %1324 = vmatpush1.msra.mxu0 %v744
      %1325 = vmatprep.subr.mxu0 0.0
      %1326 = vmatpush1.msra.mxu0 %v823
      %1327 = vmatprep.subr.mxu0 0.0
      %1328 = vmatpush1.msra.mxu0 %v902
      %1329 = vmatprep.subr.mxu0 0.0
      %1330 = vmatpush1.msra.mxu0 %v981
      %1331 = vmatprep.subr.mxu0 0.0
      %1332 = vmatpush1.msra.mxu0 %v1060
      %1333 = vmatprep.subr.mxu0 0.0
      %1334 = vmatpush1.msra.mxu0 %v1139
      %1335 = vmatprep.subr.mxu0 0.0
      %1336 = vmatpush1.msra.mxu0 %v1218
      %1337 = vmatprep.subr.mxu0 0.0
      %1338 = vmatpush1.msra.mxu0 %v1297
      %1339 = vmatprep.subr.mxu0 0.0
      %1340 = vmatpush1.msra.mxu0 0.0
      %1341 = vmatprep.subr.mxu0 0.0
      %1342 = vmatpush1.msra.mxu0 0.0
      %1343 = vmatprep.subr.mxu0 0.0
      %1344 = vmatpush1.msra.mxu0 0.0
      %1345 = vmatprep.subr.mxu0 0.0
      %1346 = vmatpush1.msra.mxu0 0.0
      %1347 = vmatprep.subr.mxu0 0.0
      %1348 = vmatpush1.msra.mxu0 0.0
      %1349 = vmatprep.subr.mxu0 0.0
      %1350 = vmatpush1.msra.mxu0 0.0
      %1351 = vmatprep.subr.mxu0 0.0
      %1352 = vmatpush1.msra.mxu0 0.0
      %1353 = vmatprep.subr.mxu0 0.0
      %1354 = vmatpush1.msra.mxu0 0.0
      %1355 = vmatprep.subr.mxu0 0.0
      %1356 = vmatpush1.msra.mxu0 0.0
      %1357 = vmatprep.subr.mxu0 0.0
      %1358 = vmatpush1.msra.mxu0 0.0
      %1359 = vmatprep.subr.mxu0 0.0
      %1360 = vmatpush1.msra.mxu0 0.0
      %1361 = vmatprep.subr.mxu0 0.0
      %1362 = vmatpush1.msra.mxu0 0.0
      %1363 = vmatprep.subr.mxu0 0.0
      %1364 = vmatpush1.msra.mxu0 0.0
      %1365 = vmatprep.subr.mxu0 0.0
      %1366 = vmatpush1.msra.mxu0 0.0
      %1367 = vmatprep.subr.mxu0 0.0
      %1368 = vmatpush1.msra.mxu0 0.0
      %1369 = vmatprep.subr.mxu0 0.0
      %1370 = vmatpush1.msra.mxu0 0.0
      %1371 = vmatprep.subr.mxu0 0.0
      %1372 = vmatpush1.msra.mxu0 0.0
      %1373 = vmatprep.subr.mxu0 0.0
      %1374 = vmatpush1.msra.mxu0 0.0
      %1375 = vmatprep.subr.mxu0 0.0
      %1376 = vmatpush1.msra.mxu0 0.0
      %1377 = vmatprep.subr.mxu0 0.0
      %1378 = vmatpush1.msra.mxu0 0.0
      %1379 = vmatprep.subr.mxu0 0.0
      %1380 = vmatpush1.msra.mxu0 0.0
      %1381 = vmatprep.subr.mxu0 0.0
      %1382 = vmatpush1.msra.mxu0 0.0
      %1383 = vmatprep.subr.mxu0 0.0
      %1384 = vmatpush1.msra.mxu0 0.0
      %1385 = vmatprep.mubr.f32.mxu0 0.0
      %1386 = vmatmul.mubr.f32.gmra.mrb[0].mxu0 %v1316
      %v1387 = vpop.f32.mrb[0].mxu0
      %v1388 = vadd.f32 %v1307, %v1387
      %v1389 = vpop.f32.mrb[0].mxu0
      %1390 = vmatprep.mubr.f32.mxu0 0.0
      %1391 = vmatmul.mubr.f32.gmra.mrb[0].mxu0 %v1319
      %v1392 = vpop.f32.mrb[0].mxu0
      %v1393 = vadd.f32 %v1312, %v1392
      %v1394 = vpop.f32.mrb[0].mxu0
      %1395 = vdwg.mxu0
      %v1396 = vmax.f32 %v1388, 0.0
      %v1397 = vmax.f32 %v1393, 0.0
      %1398 = vst.msk [vmem:[%s251] sm:$0xff] %vm594, %v1396
      %1399 = vst.msk [vmem:[%s251 + $0x8] sm:$0xff] %vm594, %v1397
      %p1400 = scmp.lt.s32.totalorder %s17, 1
      %s1401 = scalar_select %p1400, %s17, 1
      %s1402 = smul.addr %s1401, 2
      %s1403 = smul.addr %s1402, 8
      %s1404 = scalar_lea.vmem %s6, %s1403
      // Predicated region
      $region45: #{encoder_forward.1} parent=43 // pred_check
        %p1405 = pneg %p166
      $region46: #{encoder_forward.1} parent=43 // pred_check_branch
        %1407 = sbr.rel (%p1405) target = $region48
      $region47: #{encoder_forward.1} parent=43 // pred_region
        _
      $region48: #{encoder_forward.1} parent=43 // pred_fallthru
        _
    $region44: #{encoder_forward.1} parent=5 // pred_fallthru
      _
    %p1408 = scmp.le.s32.totalorder 2, %s12
    // Predicated region
    $region49: #{encoder_forward.1} parent=5 // pred_check
      %p1409 = pneg %p1408
    $region50: #{encoder_forward.1} parent=5 // pred_check_branch
      %1411 = sbr.rel (%p1409) target = $region52
    $region51: #{encoder_forward.1} parent=5 // pred_region
      %s1412 = ssub.s32 %s12, 2
      // Predicated region
      $region53: #{encoder_forward.1} parent=51 // pred_check
        %p1413 = pneg %p172
      $region54: #{encoder_forward.1} parent=51 // pred_check_branch
        %1415 = sbr.rel (%p1413) target = $region56
      $region55: #{encoder_forward.1} parent=51 // pred_region
        %p1416 = scmp.lt.s32.totalorder %s18, 1
        %s1417 = scalar_select %p1416, %s18, 1
        %s1418 = smul.addr %s1417, 2
        %s1419 = smul.addr %s1418, 8
        %s1420 = scalar_lea.vmem %s6, %s1419
      $region56: #{encoder_forward.1} parent=51 // pred_fallthru
        _
    $region52: #{encoder_forward.1} parent=5 // pred_fallthru
      _
  $region6: #{encoder_forward.1} parent=0 // loop_footer
    %s16 = sadd.s32 1, %s12
  $region7: #{encoder_forward.1} parent=0 // loop_footer_branch
    %11 = sbr.rel target = $region3
  $region8: #{encoder_forward.1} parent=0 // loop_exit
    _

</llo_original>
